<compile_context>
chip_gen: v7x
topology: tpu7x:2x2x1
jax: 0.10.0
libtpu: 0.0.40
codegen_flags: <defaults>
</compile_context>

<pallas_src>
import math
from functools import partial

import jax
import jax.numpy as jnp
from jax import lax
from jax.experimental import pallas as pl
from jax.experimental.pallas import tpu as pltpu


# ----------------------------- Pallas kernel --------------------------------

def attention_block_kernel(x_ref, gmat_ref, gmatT_ref, gamma_ref, beta_ref,
                           wqkv_ref, bqkv_ref, wproj_ref, bproj_ref,
                           o_ref,
                           qkv_s, a_s,
                           *, num_heads, num_groups, eps, kv_tile, q_tile):
    x = x_ref[0]                                    # [C, T] f32 (one batch elem)
    C, T = x.shape
    ch = C // num_heads
    n_kv = T // kv_tile
    n_q = T // q_tile
    inv_cnt = 1.0 / ((C // num_groups) * T)
    cdt = qkv_s.dtype                               # MXU input dtype (bf16/f32)

    def t32(a):
        # 2-D transpose through the 32-bit XLU path (robust lowering for narrow
        # lane dims), result cast to the MXU input dtype.
        return jnp.transpose(a.astype(jnp.float32), (1, 0)).astype(cdt)

    # ---- GroupNorm(32): two-pass (mean, then centered variance) -------------
    sum_x = jnp.sum(x, axis=1, keepdims=True)                        # [C, 1]
    mean_g = jnp.dot(gmat_ref[...], sum_x,
                     preferred_element_type=jnp.float32) * inv_cnt   # [G, 1]
    mean_c = jnp.dot(gmatT_ref[...], mean_g,
                     preferred_element_type=jnp.float32)             # [C, 1]
    xc = x - mean_c                                                  # [C, T]
    sum_sq = jnp.sum(xc * xc, axis=1, keepdims=True)                 # [C, 1]
    var_g = jnp.dot(gmat_ref[...], sum_sq,
                    preferred_element_type=jnp.float32) * inv_cnt    # [G, 1]
    rstd_c = jnp.dot(gmatT_ref[...], lax.rsqrt(var_g + eps),
                     preferred_element_type=jnp.float32)             # [C, 1]
    xn = (xc * (gamma_ref[...] * rstd_c) + beta_ref[...]).astype(cdt)  # [C, T]

    # ---- fused 1x1 conv -> qkv (rows pre-ordered [Q;K;V], scale pre-folded) -
    qkv_s[...] = (jnp.dot(wqkv_ref[...], xn,
                          preferred_element_type=jnp.float32)
                  + bqkv_ref[...]).astype(cdt)                       # [3C, T]

    # ---- per-head attention; each head writes its [ch, T] rows of a_s -------
    @pl.loop(0, num_heads)
    def _head(h):
        qo = pl.multiple_of(h * ch, ch)             # q rows
        ko = pl.multiple_of(C + h * ch, ch)         # k rows
        vo = pl.multiple_of(2 * C + h * ch, ch)     # v rows

        @pl.loop(0, n_q)
        def _qblk(qi):
            qoff = pl.multiple_of(qi * q_tile, q_tile)
            # transpose the query block ONCE per (head, q-tile), outside kv loop
            qT = t32(qkv_s[pl.ds(qo, ch), pl.ds(qoff, q_tile)])      # [q_tile, ch]

            if n_kv == 1:
                # plain softmax: full score row-block, no flash bookkeeping
                k_h = qkv_s[pl.ds(ko, ch), :]                        # [ch, T]
                v_h = qkv_s[pl.ds(vo, ch), :]                        # [ch, T]
                s = lax.dot_general(qT, k_h, (((1,), (0,)), ((), ())),
                                    preferred_element_type=jnp.float32)  # [q_tile, T]
                m = jnp.max(s, axis=-1, keepdims=True)
                p = jnp.exp(s - m)
                l = jnp.sum(p, axis=-1, keepdims=True)
                o = lax.dot_general(p.astype(cdt), v_h,
                                    (((1,), (1,)), ((), ())),
                                    preferred_element_type=jnp.float32)  # [q_tile, ch]
            else:
                # online (flash) softmax over kv tiles
                def kv_body(j, carry):
                    m_i, l_i, o_i = carry
                    koff = pl.multiple_of(j * kv_tile, kv_tile)
                    k_j = qkv_s[pl.ds(ko, ch), pl.ds(koff, kv_tile)]  # [ch, kvt]
                    v_j = qkv_s[pl.ds(vo, ch), pl.ds(koff, kv_tile)]  # [ch, kvt]
                    s = lax.dot_general(qT, k_j, (((1,), (0,)), ((), ())),
                                        preferred_element_type=jnp.float32)
                    m_new = jnp.maximum(m_i, jnp.max(s, axis=-1, keepdims=True))
                    alpha = jnp.exp(m_i - m_new)
                    p = jnp.exp(s - m_new)
                    l_new = alpha * l_i + jnp.sum(p, axis=-1, keepdims=True)
                    pv = lax.dot_general(p.astype(cdt), v_j,
                                         (((1,), (1,)), ((), ())),
                                         preferred_element_type=jnp.float32)
                    return m_new, l_new, alpha * o_i + pv

                m0 = jnp.full((q_tile, 1), -jnp.inf, dtype=jnp.float32)
                l0 = jnp.zeros((q_tile, 1), dtype=jnp.float32)
                o0 = jnp.zeros((q_tile, ch), dtype=jnp.float32)
                _, l, o = lax.fori_loop(0, n_kv, kv_body, (m0, l0, o0))

            inv_l = 1.0 / l                                          # exact recip
            # [q_tile, ch] -> [ch, q_tile] once per (head, q-tile); store rows
            a_s[pl.ds(qo, ch), pl.ds(qoff, q_tile)] = t32(o * inv_l)

    # ---- single full-depth (K = C) projection + bias + residual -------------
    h_out = jnp.dot(wproj_ref[...], a_s[...],
                    preferred_element_type=jnp.float32)              # [C, T]
    o_ref[0] = x + h_out + bproj_ref[...]


# ------------------------------- Wrapper -------------------------------------

def attention_block_pallas(x, gamma, beta, wqkv, bqkv, wproj, bproj,
                           *, num_heads, num_groups=32, eps=1e-5,
                           kv_tile=None, q_tile=None, vmem_limit_bytes=None):
    """x: [B, C, H, W] float32 -> [B, C, H, W] float32."""
    B, C, Hs, Ws = x.shape
    T = Hs * Ws
    assert C % num_heads == 0 and C % num_groups == 0
    ch = C // num_heads
    assert ch % 8 == 0, "head dim must be a multiple of 8 (sublane alignment)"
    xf = x.reshape(B, C, T).astype(jnp.float32)

    # Tiling heuristic (review): plain softmax for T <= 1024; otherwise
    # kv_tile >= 256 and ~256-row query tiles to bound the flash carry.
    if kv_tile is None:
        kv_tile = T
        if T > 1024:
            for cand in (512, 256):
                if T % cand == 0:
                    kv_tile = cand
                    break
    if q_tile is None:
        q_tile = T
        if T > 1024:
            for cand in (256, 128):
                if T % cand == 0:
                    q_tile = cand
                    break
    assert T % kv_tile == 0 and T % q_tile == 0

    # bf16 MXU inputs (f32 accumulation) when the head dim is aligned with the
    # bf16 packed-sublane tile; otherwise fall back to f32.
    cdt = jnp.bfloat16 if ch % 16 == 0 else jnp.float32

    # group one-hot membership [G, C] and its transpose [C, G]
    cg = C // num_groups
    gmat = ((jnp.arange(C) // cg)[None, :] ==
            jnp.arange(num_groups)[:, None]).astype(jnp.float32)
    gmat_T = gmat.T

    # reorder qkv weights: per-head interleaved [q_h k_h v_h] -> [Q; K; V]
    # (all heads contiguous), and fold the attention scale into W_q/W_k/b_q/b_k.
    scale = 1.0 / math.sqrt(math.sqrt(ch))
    w3 = wqkv.reshape(num_heads, 3, ch, C)
    b3 = bqkv.reshape(num_heads, 3, ch)
    wq = (w3[:, 0] * scale).reshape(C, C)
    wk = (w3[:, 1] * scale).reshape(C, C)
    wv = w3[:, 2].reshape(C, C)
    bq = (b3[:, 0] * scale).reshape(C)
    bk = (b3[:, 1] * scale).reshape(C)
    bv = b3[:, 2].reshape(C)
    wqkv_r = jnp.concatenate([wq, wk, wv], axis=0).astype(cdt)        # [3C, C]
    bqkv_r = jnp.concatenate([bq, bk, bv], axis=0
                             ).reshape(3 * C, 1).astype(jnp.float32)  # [3C, 1]

    wproj_c = wproj.astype(cdt)                                       # [C, C]
    gamma2 = gamma.reshape(C, 1).astype(jnp.float32)
    beta2 = beta.reshape(C, 1).astype(jnp.float32)
    bproj2 = bproj.reshape(C, 1).astype(jnp.float32)

    # Explicit scoped-VMEM budget from the per-step footprint (review item).
    if vmem_limit_bytes is None:
        cbytes = 2 if cdt == jnp.bfloat16 else 4
        est = (2 * 2 * 4 * C * T          # x + out blocks, f32, double-buffered
               + 4 * C * T * cbytes       # qkv (3CT) + attention-out (CT) scratch
               + 4 * C * C * cbytes       # W_qkv + W_proj
               + 4 * q_tile * kv_tile     # live f32 score tile
               + 8 * C * T)               # f32 temporaries (xc/xn/h_out) headroom
        vmem_limit_bytes = int(min(64 << 20, max(32 << 20, int(1.5 * est))))

    kernel = partial(attention_block_kernel, num_heads=num_heads,
                     num_groups=num_groups, eps=eps,
                     kv_tile=kv_tile, q_tile=q_tile)

    def const_spec(shape):
        # grid-invariant parameter: single-buffered (no revolving double buffer)
        nd = len(shape)
        return pl.BlockSpec(shape, lambda b, _n=nd: (0,) * _n,
                            pipeline_mode=pl.Buffered(1))

    out = pl.pallas_call(
        kernel,
        out_shape=jax.ShapeDtypeStruct((B, C, T), jnp.float32),
        grid_spec=pltpu.PrefetchScalarGridSpec(
            num_scalar_prefetch=0,
            grid=(B,),
            in_specs=[
                pl.BlockSpec((1, C, T), lambda b: (b, 0, 0)),   # x
                const_spec((num_groups, C)),                    # group one-hot
                const_spec((C, num_groups)),                    # its transpose
                const_spec((C, 1)),                             # gamma
                const_spec((C, 1)),                             # beta
                const_spec((3 * C, C)),                         # W_qkv (reordered, scaled)
                const_spec((3 * C, 1)),                         # b_qkv (reordered, scaled)
                const_spec((C, C)),                             # W_proj
                const_spec((C, 1)),                             # b_proj
            ],
            out_specs=pl.BlockSpec((1, C, T), lambda b: (b, 0, 0)),
            scratch_shapes=[
                pltpu.VMEM((3 * C, T), cdt),    # qkv (q scale-folded)
                pltpu.VMEM((C, T), cdt),        # attention output (head rows)
            ],
        ),
        compiler_params=pltpu.CompilerParams(
            dimension_semantics=("parallel",),
            vmem_limit_bytes=vmem_limit_bytes,
        ),
    )(xf, gmat, gmat_T, gamma2, beta2, wqkv_r, bqkv_r, wproj_c, bproj2)

    return out.reshape(B, C, Hs, Ws)


# -------------------------- Pure-JAX reference --------------------------------

def attention_block_ref(x, gamma, beta, wqkv, bqkv, wproj, bproj,
                        *, num_heads, num_groups=32, eps=1e-5):
    B, C, Hs, Ws = x.shape
    T = Hs * Ws
    xf = x.reshape(B, C, T)

    xg = xf.reshape(B, num_groups, C // num_groups, T)
    mean = xg.mean(axis=(2, 3), keepdims=True)
    var = ((xg - mean) ** 2).mean(axis=(2, 3), keepdims=True)
    xn = ((xg - mean) / jnp.sqrt(var + eps)).reshape(B, C, T)
    xn = xn * gamma[None, :, None] + beta[None, :, None]

    qkv = jnp.einsum('oc,bct->bot', wqkv, xn) + bqkv[None, :, None]

    ch = C // num_heads
    qkv_h = qkv.reshape(B * num_heads, 3 * ch, T)
    q, k, v = qkv_h[:, :ch], qkv_h[:, ch:2 * ch], qkv_h[:, 2 * ch:]
    scale = 1.0 / math.sqrt(math.sqrt(ch))
    w = jnp.einsum('bct,bcs->bts', q * scale, k * scale)
    w = jax.nn.softmax(w, axis=-1)
    a = jnp.einsum('bts,bcs->bct', w, v).reshape(B, C, T)

    h_out = jnp.einsum('oc,bct->bot', wproj, a) + bproj[None, :, None]
    return (xf + h_out).reshape(B, C, Hs, Ws)


# --------------------------------- Main ---------------------------------------

if __name__ == "__main__":
    def run_case(B, C, Hs, Ws, num_heads, seed):
        key = jax.random.PRNGKey(seed)
        keys = jax.random.split(key, 7)
        x     = jax.random.normal(keys[0], (B, C, Hs, Ws), dtype=jnp.float32)
        gamma = 1.0 + 0.1 * jax.random.normal(keys[1], (C,), dtype=jnp.float32)
        beta  = 0.1 * jax.random.normal(keys[2], (C,), dtype=jnp.float32)
        wqkv  = 0.1 * jax.random.normal(keys[3], (3 * C, C), dtype=jnp.float32)
        bqkv  = 0.1 * jax.random.normal(keys[4], (3 * C,), dtype=jnp.float32)
        wproj = 0.1 * jax.random.normal(keys[5], (C, C), dtype=jnp.float32)
        bproj = 0.1 * jax.random.normal(keys[6], (C,), dtype=jnp.float32)

        out = attention_block_pallas(x, gamma, beta, wqkv, bqkv, wproj, bproj,
                                     num_heads=num_heads)
        out = jax.block_until_ready(out)

        ref = attention_block_ref(x, gamma, beta, wqkv, bqkv, wproj, bproj,
                                  num_heads=num_heads)
        ref = jax.block_until_ready(ref)

        assert out.shape == (B, C, Hs, Ws)
        # bf16 MXU inputs (f32 accumulation) => loosened tolerance
        assert jnp.allclose(out, ref, rtol=5e-2, atol=5e-2), (
            f"max abs err = {jnp.max(jnp.abs(out - ref))}")

    # small shape: plain-softmax path (T = 256 <= 1024 -> kv_tile = q_tile = T)
    run_case(B=2, C=64, Hs=16, Ws=16, num_heads=4, seed=0)
    # larger spatial: flash path with query tiling (T = 2304 -> kv_tile = q_tile = 256)
    run_case(B=1, C=64, Hs=48, Ws=48, num_heads=4, seed=1)

    print("KERNEL_OK")
</pallas_src>

<mosaic_0001>
module attributes {stable_mosaic.version = 11 : i64} {
  func.func @attention_block_kernel(%arg0: i32, %arg1: memref<1x64x256xf32, #tpu.memory_space<vmem>>, %arg2: memref<32x64xf32, #tpu.memory_space<vmem>>, %arg3: memref<64x32xf32, #tpu.memory_space<vmem>>, %arg4: memref<64x1xf32, #tpu.memory_space<vmem>>, %arg5: memref<64x1xf32, #tpu.memory_space<vmem>>, %arg6: memref<192x64xbf16, #tpu.memory_space<vmem>>, %arg7: memref<192x1xf32, #tpu.memory_space<vmem>>, %arg8: memref<64x64xbf16, #tpu.memory_space<vmem>>, %arg9: memref<64x1xf32, #tpu.memory_space<vmem>>, %arg10: memref<1x64x256xf32, #tpu.memory_space<vmem>>, %arg11: memref<192x256xbf16, #tpu.memory_space<vmem>>, %arg12: memref<64x256xbf16, #tpu.memory_space<vmem>>) attributes {dimension_semantics = [#tpu.dimension_semantics<parallel>], iteration_bounds = array<i64: 2>, scalar_prefetch = 0 : i64, scratch_operands = 2 : i64, tpu.core_type = #tpu.core_type<tc>, window_params = [{transform_indices = @transform_0, window_bounds = array<i64: 1, 64, 256>}, {pipeline_mode = #tpu.pipeline_mode<synchronous>, transform_indices = @transform_1, window_bounds = array<i64: 32, 64>}, {pipeline_mode = #tpu.pipeline_mode<synchronous>, transform_indices = @transform_2, window_bounds = array<i64: 64, 32>}, {pipeline_mode = #tpu.pipeline_mode<synchronous>, transform_indices = @transform_3, window_bounds = array<i64: 64, 1>}, {pipeline_mode = #tpu.pipeline_mode<synchronous>, transform_indices = @transform_4, window_bounds = array<i64: 64, 1>}, {pipeline_mode = #tpu.pipeline_mode<synchronous>, transform_indices = @transform_5, window_bounds = array<i64: 192, 64>}, {pipeline_mode = #tpu.pipeline_mode<synchronous>, transform_indices = @transform_6, window_bounds = array<i64: 192, 1>}, {pipeline_mode = #tpu.pipeline_mode<synchronous>, transform_indices = @transform_7, window_bounds = array<i64: 64, 64>}, {pipeline_mode = #tpu.pipeline_mode<synchronous>, transform_indices = @transform_8, window_bounds = array<i64: 64, 1>}, {transform_indices = @transform_9, window_bounds = array<i64: 1, 64, 256>}]} {
    %c0 = arith.constant 0 : index
    %c0_0 = arith.constant 0 : index
    %c0_1 = arith.constant 0 : index
    %0 = vector.load %arg1[%c0, %c0_0, %c0_1] : memref<1x64x256xf32, #tpu.memory_space<vmem>>, vector<1x64x256xf32>
    %1 = vector.shape_cast %0 : vector<1x64x256xf32> to vector<64x256xf32>
    %cst = arith.constant dense<0.000000e+00> : vector<64xf32>
    %2 = vector.multi_reduction <add>, %1, %cst [1] : vector<64x256xf32> to vector<64xf32>
    %3 = vector.shape_cast %2 : vector<64xf32> to vector<64x1xf32>
    %c0_2 = arith.constant 0 : index
    %c0_3 = arith.constant 0 : index
    %4 = vector.load %arg2[%c0_2, %c0_3] : memref<32x64xf32, #tpu.memory_space<vmem>>, vector<32x64xf32>
    %cst_4 = arith.constant dense<0.000000e+00> : vector<32x1xf32>
    %5 = tpu.matmul %4, %3, %cst_4 {dimension_numbers = #tpu.dot_dimension_numbers<[1], [0], [0], [1], [0, 0, 1, 1], [], []>} : vector<32x64xf32>, vector<64x1xf32>, vector<32x1xf32> -> vector<32x1xf32>
    %cst_5 = arith.constant 0.001953125 : f32
    %6 = vector.broadcast %cst_5 : f32 to vector<32x1xf32>
    %7 = arith.mulf %5, %6 : vector<32x1xf32>
    %c0_6 = arith.constant 0 : index
    %c0_7 = arith.constant 0 : index
    %8 = vector.load %arg3[%c0_6, %c0_7] : memref<64x32xf32, #tpu.memory_space<vmem>>, vector<64x32xf32>
    %cst_8 = arith.constant dense<0.000000e+00> : vector<64x1xf32>
    %9 = tpu.matmul %8, %7, %cst_8 {dimension_numbers = #tpu.dot_dimension_numbers<[1], [0], [0], [1], [0, 0, 1, 1], [], []>} : vector<64x32xf32>, vector<32x1xf32>, vector<64x1xf32> -> vector<64x1xf32>
    %10 = vector.broadcast %9 : vector<64x1xf32> to vector<64x256xf32>
    %11 = arith.subf %1, %10 : vector<64x256xf32>
    %12 = arith.mulf %11, %11 : vector<64x256xf32>
    %cst_9 = arith.constant dense<0.000000e+00> : vector<64xf32>
    %13 = vector.multi_reduction <add>, %12, %cst_9 [1] : vector<64x256xf32> to vector<64xf32>
    %14 = vector.shape_cast %13 : vector<64xf32> to vector<64x1xf32>
    %c0_10 = arith.constant 0 : index
    %c0_11 = arith.constant 0 : index
    %15 = vector.load %arg2[%c0_10, %c0_11] : memref<32x64xf32, #tpu.memory_space<vmem>>, vector<32x64xf32>
    %cst_12 = arith.constant dense<0.000000e+00> : vector<32x1xf32>
    %16 = tpu.matmul %15, %14, %cst_12 {dimension_numbers = #tpu.dot_dimension_numbers<[1], [0], [0], [1], [0, 0, 1, 1], [], []>} : vector<32x64xf32>, vector<64x1xf32>, vector<32x1xf32> -> vector<32x1xf32>
    %cst_13 = arith.constant 0.001953125 : f32
    %17 = vector.broadcast %cst_13 : f32 to vector<32x1xf32>
    %18 = arith.mulf %16, %17 : vector<32x1xf32>
    %c0_14 = arith.constant 0 : index
    %c0_15 = arith.constant 0 : index
    %19 = vector.load %arg3[%c0_14, %c0_15] : memref<64x32xf32, #tpu.memory_space<vmem>>, vector<64x32xf32>
    %cst_16 = arith.constant 9.99999974E-6 : f32
    %20 = vector.broadcast %cst_16 : f32 to vector<32x1xf32>
    %21 = arith.addf %18, %20 : vector<32x1xf32>
    %22 = math.rsqrt %21 : vector<32x1xf32>
    %cst_17 = arith.constant dense<0.000000e+00> : vector<64x1xf32>
    %23 = tpu.matmul %19, %22, %cst_17 {dimension_numbers = #tpu.dot_dimension_numbers<[1], [0], [0], [1], [0, 0, 1, 1], [], []>} : vector<64x32xf32>, vector<32x1xf32>, vector<64x1xf32> -> vector<64x1xf32>
    %c0_18 = arith.constant 0 : index
    %c0_19 = arith.constant 0 : index
    %24 = vector.load %arg4[%c0_18, %c0_19] : memref<64x1xf32, #tpu.memory_space<vmem>>, vector<64x1xf32>
    %25 = arith.mulf %24, %23 : vector<64x1xf32>
    %26 = vector.broadcast %25 : vector<64x1xf32> to vector<64x256xf32>
    %27 = arith.mulf %11, %26 : vector<64x256xf32>
    %c0_20 = arith.constant 0 : index
    %c0_21 = arith.constant 0 : index
    %28 = vector.load %arg5[%c0_20, %c0_21] : memref<64x1xf32, #tpu.memory_space<vmem>>, vector<64x1xf32>
    %29 = vector.broadcast %28 : vector<64x1xf32> to vector<64x256xf32>
    %30 = arith.addf %27, %29 : vector<64x256xf32>
    %31 = arith.truncf %30 : vector<64x256xf32> to vector<64x256xbf16>
    %c0_22 = arith.constant 0 : index
    %c0_23 = arith.constant 0 : index
    %32 = vector.load %arg6[%c0_22, %c0_23] : memref<192x64xbf16, #tpu.memory_space<vmem>>, vector<192x64xbf16>
    %cst_24 = arith.constant dense<0.000000e+00> : vector<192x256xf32>
    %33 = tpu.matmul %32, %31, %cst_24 {dimension_numbers = #tpu.dot_dimension_numbers<[1], [0], [0], [1], [0, 0, 1, 1], [], []>} : vector<192x64xbf16>, vector<64x256xbf16>, vector<192x256xf32> -> vector<192x256xf32>
    %c0_25 = arith.constant 0 : index
    %c0_26 = arith.constant 0 : index
    %34 = vector.load %arg7[%c0_25, %c0_26] : memref<192x1xf32, #tpu.memory_space<vmem>>, vector<192x1xf32>
    %35 = vector.broadcast %34 : vector<192x1xf32> to vector<192x256xf32>
    %36 = arith.addf %33, %35 : vector<192x256xf32>
    %37 = arith.truncf %36 : vector<192x256xf32> to vector<192x256xbf16>
    %c0_27 = arith.constant 0 : index
    %c0_28 = arith.constant 0 : index
    %38 = vector.load %arg11[%c0_27, %c0_28] : memref<192x256xbf16, #tpu.memory_space<vmem>>, vector<192x256xbf16>
    tpu.vector_store %arg11[%c0_27, %c0_28], %37 {strides = array<i32>} : memref<192x256xbf16, #tpu.memory_space<vmem>>, vector<192x256xbf16>,
    %c0_i32 = arith.constant 0 : i32
    %c4_i32 = arith.constant 4 : i32
    %39 = arith.addi %c0_i32, %c4_i32 : i32
    %c1_i32 = arith.constant 1 : i32
    scf.for %arg13 = %c0_i32 to %39 step %c1_i32  : i32 {
      %c1_i32_40 = arith.constant 1 : i32
      %50 = arith.muli %arg13, %c1_i32_40 : i32
      %c0_i32_41 = arith.constant 0 : i32
      %51 = arith.addi %c0_i32_41, %50 : i32
      %c16_i32 = arith.constant 16 : i32
      %52 = arith.muli %51, %c16_i32 : i32
      %53 = tpu.assume_multiple %52, 16 : i32
      %c16_i32_42 = arith.constant 16 : i32
      %54 = arith.muli %51, %c16_i32_42 : i32
      %c64_i32 = arith.constant 64 : i32
      %55 = arith.addi %c64_i32, %54 : i32
      %56 = tpu.assume_multiple %55, 16 : i32
      %c16_i32_43 = arith.constant 16 : i32
      %57 = arith.muli %51, %c16_i32_43 : i32
      %c128_i32 = arith.constant 128 : i32
      %58 = arith.addi %c128_i32, %57 : i32
      %59 = tpu.assume_multiple %58, 16 : i32
      %c0_i32_44 = arith.constant 0 : i32
      %c1_i32_45 = arith.constant 1 : i32
      %60 = arith.muli %c0_i32_44, %c1_i32_45 : i32
      %c0_i32_46 = arith.constant 0 : i32
      %61 = arith.addi %c0_i32_46, %60 : i32
      %c256_i32 = arith.constant 256 : i32
      %62 = arith.muli %61, %c256_i32 : i32
      %63 = tpu.assume_multiple %62, 256 : i32
      %64 = arith.index_cast %53 : i32 to index
      %65 = arith.index_cast %63 : i32 to index
      %66 = vector.load %arg11[%64, %65] : memref<192x256xbf16, #tpu.memory_space<vmem>>, vector<16x256xbf16>
      %67 = arith.extf %66 : vector<16x256xbf16> to vector<16x256xf32>
      %68 = tpu.transpose %67, [1, 0] : vector<16x256xf32> -> vector<256x16xf32>
      %69 = arith.truncf %68 : vector<256x16xf32> to vector<256x16xbf16>
      %70 = arith.index_cast %56 : i32 to index
      %c0_47 = arith.constant 0 : index
      %71 = vector.load %arg11[%70, %c0_47] : memref<192x256xbf16, #tpu.memory_space<vmem>>, vector<16x256xbf16>
      %72 = arith.index_cast %59 : i32 to index
      %c0_48 = arith.constant 0 : index
      %73 = vector.load %arg11[%72, %c0_48] : memref<192x256xbf16, #tpu.memory_space<vmem>>, vector<16x256xbf16>
      %cst_49 = arith.constant dense<0.000000e+00> : vector<256x256xf32>
      %74 = tpu.matmul %69, %71, %cst_49 {dimension_numbers = #tpu.dot_dimension_numbers<[1], [0], [0], [1], [0, 0, 1, 1], [], []>} : vector<256x16xbf16>, vector<16x256xbf16>, vector<256x256xf32> -> vector<256x256xf32>
      %cst_50 = arith.constant dense<0xFF800000> : vector<256xf32>
      %75 = vector.multi_reduction <maximumf>, %74, %cst_50 [1] : vector<256x256xf32> to vector<256xf32>
      %76 = vector.shape_cast %75 : vector<256xf32> to vector<256x1xf32>
      %77 = vector.broadcast %76 : vector<256x1xf32> to vector<256x256xf32>
      %78 = arith.subf %74, %77 : vector<256x256xf32>
      %79 = math.exp %78 : vector<256x256xf32>
      %cst_51 = arith.constant dense<0.000000e+00> : vector<256xf32>
      %80 = vector.multi_reduction <add>, %79, %cst_51 [1] : vector<256x256xf32> to vector<256xf32>
      %81 = vector.shape_cast %80 : vector<256xf32> to vector<256x1xf32>
      %82 = arith.truncf %79 : vector<256x256xf32> to vector<256x256xbf16>
      %cst_52 = arith.constant dense<0.000000e+00> : vector<256x16xf32>
      %83 = tpu.matmul %82, %73, %cst_52 {dimension_numbers = #tpu.dot_dimension_numbers<[1], [1], [0], [0], [0, 0, 1, 0], [], []>} : vector<256x256xbf16>, vector<16x256xbf16>, vector<256x16xf32> -> vector<256x16xf32>
      %cst_53 = arith.constant 1.000000e+00 : f32
      %84 = vector.broadcast %cst_53 : f32 to vector<256x1xf32>
      %85 = arith.divf %84, %81 : vector<256x1xf32>
      %86 = vector.broadcast %85 : vector<256x1xf32> to vector<256x16xf32>
      %87 = arith.mulf %83, %86 : vector<256x16xf32>
      %88 = tpu.transpose %87, [1, 0] : vector<256x16xf32> -> vector<16x256xf32>
      %89 = arith.truncf %88 : vector<16x256xf32> to vector<16x256xbf16>
      %90 = arith.index_cast %53 : i32 to index
      %91 = arith.index_cast %63 : i32 to index
      %92 = vector.load %arg12[%90, %91] : memref<64x256xbf16, #tpu.memory_space<vmem>>, vector<16x256xbf16>
      tpu.vector_store %arg12[%90, %91], %89 {strides = array<i32>} : memref<64x256xbf16, #tpu.memory_space<vmem>>, vector<16x256xbf16>,
      %c1_i32_54 = arith.constant 1 : i32
    }
    %c4_i32_29 = arith.constant 4 : i32
    %c0_30 = arith.constant 0 : index
    %c0_31 = arith.constant 0 : index
    %40 = vector.load %arg8[%c0_30, %c0_31] : memref<64x64xbf16, #tpu.memory_space<vmem>>, vector<64x64xbf16>
    %c0_32 = arith.constant 0 : index
    %c0_33 = arith.constant 0 : index
    %41 = vector.load %arg12[%c0_32, %c0_33] : memref<64x256xbf16, #tpu.memory_space<vmem>>, vector<64x256xbf16>
    %cst_34 = arith.constant dense<0.000000e+00> : vector<64x256xf32>
    %42 = tpu.matmul %40, %41, %cst_34 {dimension_numbers = #tpu.dot_dimension_numbers<[1], [0], [0], [1], [0, 0, 1, 1], [], []>} : vector<64x64xbf16>, vector<64x256xbf16>, vector<64x256xf32> -> vector<64x256xf32>
    %43 = arith.addf %1, %42 : vector<64x256xf32>
    %c0_35 = arith.constant 0 : index
    %c0_36 = arith.constant 0 : index
    %44 = vector.load %arg9[%c0_35, %c0_36] : memref<64x1xf32, #tpu.memory_space<vmem>>, vector<64x1xf32>
    %45 = vector.broadcast %44 : vector<64x1xf32> to vector<64x256xf32>
    %46 = arith.addf %43, %45 : vector<64x256xf32>
    %c0_37 = arith.constant 0 : index
    %c0_38 = arith.constant 0 : index
    %c0_39 = arith.constant 0 : index
    %47 = vector.load %arg10[%c0_37, %c0_38, %c0_39] : memref<1x64x256xf32, #tpu.memory_space<vmem>>, vector<1x64x256xf32>
    %48 = vector.shape_cast %47 : vector<1x64x256xf32> to vector<64x256xf32>
    %49 = vector.shape_cast %46 : vector<64x256xf32> to vector<1x64x256xf32>
    tpu.vector_store %arg10[%c0_37, %c0_38, %c0_39], %49 {strides = array<i32>} : memref<1x64x256xf32, #tpu.memory_space<vmem>>, vector<1x64x256xf32>,
    return
  }
  func.func @transform_0(%arg0: i32) -> (i32, i32, i32) {
    %c0_i32 = arith.constant 0 : i32
    %c0_i32_0 = arith.constant 0 : i32
    %c0_i32_1 = arith.constant 0 : i32
    return %arg0, %c0_i32, %c0_i32_0 : i32, i32, i32
  }
  func.func @transform_1(%arg0: i32) -> (i32, i32) {
    %c0_i32 = arith.constant 0 : i32
    %c0_i32_0 = arith.constant 0 : i32
    %c0_i32_1 = arith.constant 0 : i32
    return %c0_i32, %c0_i32_0 : i32, i32
  }
  func.func @transform_2(%arg0: i32) -> (i32, i32) {
    %c0_i32 = arith.constant 0 : i32
    %c0_i32_0 = arith.constant 0 : i32
    %c0_i32_1 = arith.constant 0 : i32
    return %c0_i32, %c0_i32_0 : i32, i32
  }
  func.func @transform_3(%arg0: i32) -> (i32, i32) {
    %c0_i32 = arith.constant 0 : i32
    %c0_i32_0 = arith.constant 0 : i32
    %c0_i32_1 = arith.constant 0 : i32
    return %c0_i32, %c0_i32_0 : i32, i32
  }
  func.func @transform_4(%arg0: i32) -> (i32, i32) {
    %c0_i32 = arith.constant 0 : i32
    %c0_i32_0 = arith.constant 0 : i32
    %c0_i32_1 = arith.constant 0 : i32
    return %c0_i32, %c0_i32_0 : i32, i32
  }
  func.func @transform_5(%arg0: i32) -> (i32, i32) {
    %c0_i32 = arith.constant 0 : i32
    %c0_i32_0 = arith.constant 0 : i32
    %c0_i32_1 = arith.constant 0 : i32
    return %c0_i32, %c0_i32_0 : i32, i32
  }
  func.func @transform_6(%arg0: i32) -> (i32, i32) {
    %c0_i32 = arith.constant 0 : i32
    %c0_i32_0 = arith.constant 0 : i32
    %c0_i32_1 = arith.constant 0 : i32
    return %c0_i32, %c0_i32_0 : i32, i32
  }
  func.func @transform_7(%arg0: i32) -> (i32, i32) {
    %c0_i32 = arith.constant 0 : i32
    %c0_i32_0 = arith.constant 0 : i32
    %c0_i32_1 = arith.constant 0 : i32
    return %c0_i32, %c0_i32_0 : i32, i32
  }
  func.func @transform_8(%arg0: i32) -> (i32, i32) {
    %c0_i32 = arith.constant 0 : i32
    %c0_i32_0 = arith.constant 0 : i32
    %c0_i32_1 = arith.constant 0 : i32
    return %c0_i32, %c0_i32_0 : i32, i32
  }
  func.func @transform_9(%arg0: i32) -> (i32, i32, i32) {
    %c0_i32 = arith.constant 0 : i32
    %c0_i32_0 = arith.constant 0 : i32
    %c0_i32_1 = arith.constant 0 : i32
    return %arg0, %c0_i32, %c0_i32_0 : i32, i32, i32
  }
}

</mosaic_0001>

<llo_original>
// kernel: tpu_custom_call.1
$region0: #{tpu_custom_call.1}
  #allocation0 [shape = 'u32[]', space=smem, size = 0x4, offset = 0x4, fixed_abs, tag = 'smem constant byte address 0x4 - core index']
  #allocation1 [shape = 'u32[144,128]{1,0:T(1,128)}', space=vmem, size = 0x12000, scoped, tag = 'internal scratch']
  #allocation2 [shape = 'bf16[192,256]{1,0:T(16,128)(2,1)}', space=vmem, size = 0x18000, scoped, tag = 'scratch operand']
  #allocation3 [shape = 'bf16[64,256]{1,0:T(16,128)(2,1)}', space=vmem, size = 0x8000, scoped, tag = 'scratch operand']
  %s0 = inlined_call_operand.vmem [shape: f32[2,64,256], index: 0, kind: input, shape index: {}]
  %s1 = inlined_call_operand.vmem [shape: f32[32,64], index: 1, kind: input, shape index: {}]
  %s2 = inlined_call_operand.vmem [shape: f32[64,32], index: 2, kind: input, shape index: {}]
  %s3 = inlined_call_operand.vmem [shape: f32[64,1], index: 3, kind: input, shape index: {}]
  %s4 = inlined_call_operand.vmem [shape: f32[64,1], index: 4, kind: input, shape index: {}]
  %s5 = inlined_call_operand.vmem [shape: bf16[192,64], index: 5, kind: input, shape index: {}]
  %s6 = inlined_call_operand.vmem [shape: f32[192,1], index: 6, kind: input, shape index: {}]
  %s7 = inlined_call_operand.vmem [shape: bf16[64,64], index: 7, kind: input, shape index: {}]
  %s8 = inlined_call_operand.vmem [shape: f32[64,1], index: 8, kind: input, shape index: {}]
  %s9 = inlined_call_operand.hbm [shape: f32[2,64,256], index: 9, kind: output, shape index: {}]
  %s10 = sld [smem:[#allocation0]]
  $region76: #{tpu_custom_call.1} parent=0
    _
  %s12 = ssub.s32 1, %s10
  %s13 = scalar_select 0, %s12, %s10
  $region1: #{tpu_custom_call.1} parent=0
    #allocation4 [shape = 'u8[131072]{0}', space=vmem, size = 0x20000, scoped, tag = 'output window, operand 0']
    #allocation5 [shape = 's32[2]{0}', space=sflag, size = 0x8, scoped, tag = 'scoped memory for tpu_custom_call.1']
    %14 = vsyncpa [#allocation5], 0
    %s15 = scalar_lea.sflag [#allocation5], 1
    %16 = vsyncpa %s15, 0
    loop: start=0, step=1, limit=4
    $region2: #{tpu_custom_call.1} parent=1 // loop_pre_header
      _
    $region3: #{tpu_custom_call.1} parent=1 // loop_header
      %s18 = sphi 0, %s22
      %p19 = scmp.ge.s32.totalorder %s18, 4
      %s28 = sphi 0, %s30
      %s31 = sphi 0, %s28
      %s32 = sphi 0, %s31
      %s48 = sphi 0, %s32
      %s52 = sphi 0, %s52
      %s54 = sphi 0, %s52
      %s55 = sphi 0, %s54
      %s69 = sphi 0, %s55
      %s73 = sphi 0, %s73
      %s75 = sphi 0, %s73
      %s76 = sphi 0, %s75
      %s90 = sphi 0, %s76
      %s94 = sphi 0, %s94
      %s96 = sphi 0, %s94
      %s97 = sphi 0, %s96
      %s111 = sphi 0, %s97
      %s115 = sphi 0, %s115
      %s117 = sphi 0, %s115
      %s118 = sphi 0, %s117
      %s132 = sphi 0, %s118
      %s136 = sphi 0, %s136
      %s138 = sphi 0, %s136
      %s139 = sphi 0, %s138
      %s153 = sphi 0, %s139
      %s157 = sphi 0, %s157
      %s159 = sphi 0, %s157
      %s160 = sphi 0, %s159
      %s174 = sphi 0, %s160
      %s178 = sphi 0, %s178
      %s180 = sphi 0, %s178
      %s181 = sphi 0, %s180
      %s195 = sphi 0, %s181
      %s199 = sphi 0, %s199
      %s201 = sphi 0, %s199
      %s202 = sphi 0, %s201
      %s216 = sphi 0, %s202
      %s222 = sphi 0, %s224
      %s225 = sphi 0, %s222
      %s226 = sphi 0, %s225
      %s242 = sphi 0, %s226
    $region4: #{tpu_custom_call.1} parent=1 // loop_header_branch
      %21 = sbr.rel (%p19) target = $region8
    $region5: #{tpu_custom_call.1} parent=1 // loop_body
      %s23 = ssub.s32 %s18, 1
      %s24 = ssub.s32 %s18, 2
      %s25 = sadd.s32 %s18, 1
      %s26 = ssub.s32 %s18, %s25
      %p27 = scmp.eq.s32.totalorder %s26, 0
      %s29 = sadd.s32 %s28, 1
      %s30 = scalar_select %p27, %s28, %s29
      %p33 = pneg %p27
      %p34 = scmp.eq.s32.totalorder %s18, 1
      %p35 = por %p33, %p34
      %p36 = scmp.ne.s32.totalorder %s28, %s31
      %p37 = scmp.eq.s32.totalorder %s18, 0
      %p38 = por %p36, %p37
      %p39 = scmp.ne.s32.totalorder %s28, %s31
      %p40 = scmp.eq.s32.totalorder %s23, 1
      %p41 = por %p39, %p40
      %p42 = scmp.ne.s32.totalorder %s31, %s32
      %p43 = scmp.eq.s32.totalorder %s23, 0
      %p44 = por %p42, %p43
      %p45 = scmp.ne.s32.totalorder %s31, %s32
      %p46 = scmp.eq.s32.totalorder %s24, 1
      %p47 = por %p45, %p46
      %p49 = scmp.ne.s32.totalorder %s32, %s48
      %p50 = scmp.eq.s32.totalorder %s24, 0
      %p51 = por %p49, %p50
      %s53 = sadd.s32 %s52, 1
      %p56 = scmp.eq.s32.totalorder %s18, 1
      %p57 = scmp.ne.s32.totalorder %s52, %s54
      %p58 = scmp.eq.s32.totalorder %s18, 0
      %p59 = por %p57, %p58
      %p60 = scmp.ne.s32.totalorder %s52, %s54
      %p61 = scmp.eq.s32.totalorder %s23, 1
      %p62 = por %p60, %p61
      %p63 = scmp.ne.s32.totalorder %s54, %s55
      %p64 = scmp.eq.s32.totalorder %s23, 0
      %p65 = por %p63, %p64
      %p66 = scmp.ne.s32.totalorder %s54, %s55
      %p67 = scmp.eq.s32.totalorder %s24, 1
      %p68 = por %p66, %p67
      %p70 = scmp.ne.s32.totalorder %s55, %s69
      %p71 = scmp.eq.s32.totalorder %s24, 0
      %p72 = por %p70, %p71
      %s74 = sadd.s32 %s73, 1
      %p77 = scmp.eq.s32.totalorder %s18, 1
      %p78 = scmp.ne.s32.totalorder %s73, %s75
      %p79 = scmp.eq.s32.totalorder %s18, 0
      %p80 = por %p78, %p79
      %p81 = scmp.ne.s32.totalorder %s73, %s75
      %p82 = scmp.eq.s32.totalorder %s23, 1
      %p83 = por %p81, %p82
      %p84 = scmp.ne.s32.totalorder %s75, %s76
      %p85 = scmp.eq.s32.totalorder %s23, 0
      %p86 = por %p84, %p85
      %p87 = scmp.ne.s32.totalorder %s75, %s76
      %p88 = scmp.eq.s32.totalorder %s24, 1
      %p89 = por %p87, %p88
      %p91 = scmp.ne.s32.totalorder %s76, %s90
      %p92 = scmp.eq.s32.totalorder %s24, 0
      %p93 = por %p91, %p92
      %s95 = sadd.s32 %s94, 1
      %p98 = scmp.eq.s32.totalorder %s18, 1
      %p99 = scmp.ne.s32.totalorder %s94, %s96
      %p100 = scmp.eq.s32.totalorder %s18, 0
      %p101 = por %p99, %p100
      %p102 = scmp.ne.s32.totalorder %s94, %s96
      %p103 = scmp.eq.s32.totalorder %s23, 1
      %p104 = por %p102, %p103
      %p105 = scmp.ne.s32.totalorder %s96, %s97
      %p106 = scmp.eq.s32.totalorder %s23, 0
      %p107 = por %p105, %p106
      %p108 = scmp.ne.s32.totalorder %s96, %s97
      %p109 = scmp.eq.s32.totalorder %s24, 1
      %p110 = por %p108, %p109
      %p112 = scmp.ne.s32.totalorder %s97, %s111
      %p113 = scmp.eq.s32.totalorder %s24, 0
      %p114 = por %p112, %p113
      %s116 = sadd.s32 %s115, 1
      %p119 = scmp.eq.s32.totalorder %s18, 1
      %p120 = scmp.ne.s32.totalorder %s115, %s117
      %p121 = scmp.eq.s32.totalorder %s18, 0
      %p122 = por %p120, %p121
      %p123 = scmp.ne.s32.totalorder %s115, %s117
      %p124 = scmp.eq.s32.totalorder %s23, 1
      %p125 = por %p123, %p124
      %p126 = scmp.ne.s32.totalorder %s117, %s118
      %p127 = scmp.eq.s32.totalorder %s23, 0
      %p128 = por %p126, %p127
      %p129 = scmp.ne.s32.totalorder %s117, %s118
      %p130 = scmp.eq.s32.totalorder %s24, 1
      %p131 = por %p129, %p130
      %p133 = scmp.ne.s32.totalorder %s118, %s132
      %p134 = scmp.eq.s32.totalorder %s24, 0
      %p135 = por %p133, %p134
      %s137 = sadd.s32 %s136, 1
      %p140 = scmp.eq.s32.totalorder %s18, 1
      %p141 = scmp.ne.s32.totalorder %s136, %s138
      %p142 = scmp.eq.s32.totalorder %s18, 0
      %p143 = por %p141, %p142
      %p144 = scmp.ne.s32.totalorder %s136, %s138
      %p145 = scmp.eq.s32.totalorder %s23, 1
      %p146 = por %p144, %p145
      %p147 = scmp.ne.s32.totalorder %s138, %s139
      %p148 = scmp.eq.s32.totalorder %s23, 0
      %p149 = por %p147, %p148
      %p150 = scmp.ne.s32.totalorder %s138, %s139
      %p151 = scmp.eq.s32.totalorder %s24, 1
      %p152 = por %p150, %p151
      %p154 = scmp.ne.s32.totalorder %s139, %s153
      %p155 = scmp.eq.s32.totalorder %s24, 0
      %p156 = por %p154, %p155
      %s158 = sadd.s32 %s157, 1
      %p161 = scmp.eq.s32.totalorder %s18, 1
      %p162 = scmp.ne.s32.totalorder %s157, %s159
      %p163 = scmp.eq.s32.totalorder %s18, 0
      %p164 = por %p162, %p163
      %p165 = scmp.ne.s32.totalorder %s157, %s159
      %p166 = scmp.eq.s32.totalorder %s23, 1
      %p167 = por %p165, %p166
      %p168 = scmp.ne.s32.totalorder %s159, %s160
      %p169 = scmp.eq.s32.totalorder %s23, 0
      %p170 = por %p168, %p169
      %p171 = scmp.ne.s32.totalorder %s159, %s160
      %p172 = scmp.eq.s32.totalorder %s24, 1
      %p173 = por %p171, %p172
      %p175 = scmp.ne.s32.totalorder %s160, %s174
      %p176 = scmp.eq.s32.totalorder %s24, 0
      %p177 = por %p175, %p176
      %s179 = sadd.s32 %s178, 1
      %p182 = scmp.eq.s32.totalorder %s18, 1
      %p183 = scmp.ne.s32.totalorder %s178, %s180
      %p184 = scmp.eq.s32.totalorder %s18, 0
      %p185 = por %p183, %p184
      %p186 = scmp.ne.s32.totalorder %s178, %s180
      %p187 = scmp.eq.s32.totalorder %s23, 1
      %p188 = por %p186, %p187
      %p189 = scmp.ne.s32.totalorder %s180, %s181
      %p190 = scmp.eq.s32.totalorder %s23, 0
      %p191 = por %p189, %p190
      %p192 = scmp.ne.s32.totalorder %s180, %s181
      %p193 = scmp.eq.s32.totalorder %s24, 1
      %p194 = por %p192, %p193
      %p196 = scmp.ne.s32.totalorder %s181, %s195
      %p197 = scmp.eq.s32.totalorder %s24, 0
      %p198 = por %p196, %p197
      %s200 = sadd.s32 %s199, 1
      %p203 = scmp.eq.s32.totalorder %s18, 1
      %p204 = scmp.ne.s32.totalorder %s199, %s201
      %p205 = scmp.eq.s32.totalorder %s18, 0
      %p206 = por %p204, %p205
      %p207 = scmp.ne.s32.totalorder %s199, %s201
      %p208 = scmp.eq.s32.totalorder %s23, 1
      %p209 = por %p207, %p208
      %p210 = scmp.ne.s32.totalorder %s201, %s202
      %p211 = scmp.eq.s32.totalorder %s23, 0
      %p212 = por %p210, %p211
      %p213 = scmp.ne.s32.totalorder %s201, %s202
      %p214 = scmp.eq.s32.totalorder %s24, 1
      %p215 = por %p213, %p214
      %p217 = scmp.ne.s32.totalorder %s202, %s216
      %p218 = scmp.eq.s32.totalorder %s24, 0
      %p219 = por %p217, %p218
      %s220 = ssub.s32 %s18, %s25
      %p221 = scmp.eq.s32.totalorder %s220, 0
      %s223 = sadd.s32 %s222, 1
      %s224 = scalar_select %p221, %s222, %s223
      %p227 = pneg %p221
      %p228 = scmp.eq.s32.totalorder %s18, 1
      %p229 = por %p227, %p228
      %p230 = scmp.ne.s32.totalorder %s222, %s225
      %p231 = scmp.eq.s32.totalorder %s18, 0
      %p232 = por %p230, %p231
      %p233 = scmp.ne.s32.totalorder %s222, %s225
      %p234 = scmp.eq.s32.totalorder %s23, 1
      %p235 = por %p233, %p234
      %p236 = scmp.ne.s32.totalorder %s225, %s226
      %p237 = scmp.eq.s32.totalorder %s23, 0
      %p238 = por %p236, %p237
      %p239 = scmp.ne.s32.totalorder %s225, %s226
      %p240 = scmp.eq.s32.totalorder %s24, 1
      %p241 = por %p239, %p240
      %p243 = scmp.ne.s32.totalorder %s226, %s242
      %p244 = scmp.eq.s32.totalorder %s24, 0
      %p245 = por %p243, %p244
      %p246 = scmp.le.s32.totalorder 1, %s18
      %p247 = scmp.lt.s32.totalorder %s18, 3
      %p248 = pnand %p246, %p247
      %p249 = pneg %p248
      // Predicated region
      $region9: #{tpu_custom_call.1} parent=5 // pred_check
        _
      $region10: #{tpu_custom_call.1} parent=5 // pred_check_branch
        %251 = sbr.rel (%p248) target = $region12
      $region11: #{tpu_custom_call.1} parent=5 // pred_region
        %s252 = ssub.s32 %s18, 1
        // Predicated region
        $region13: #{tpu_custom_call.1} parent=11 // pred_check
          %p253 = pneg %p65
        $region14: #{tpu_custom_call.1} parent=11 // pred_check_branch
          %255 = sbr.rel (%p253) target = $region16
        $region15: #{tpu_custom_call.1} parent=11 // pred_region
          _
        $region16: #{tpu_custom_call.1} parent=11 // pred_fallthru
          _
        // Predicated region
        $region17: #{tpu_custom_call.1} parent=11 // pred_check
          %p256 = pneg %p86
        $region18: #{tpu_custom_call.1} parent=11 // pred_check_branch
          %258 = sbr.rel (%p256) target = $region20
        $region19: #{tpu_custom_call.1} parent=11 // pred_region
          _
        $region20: #{tpu_custom_call.1} parent=11 // pred_fallthru
          _
        // Predicated region
        $region21: #{tpu_custom_call.1} parent=11 // pred_check
          %p259 = pneg %p107
        $region22: #{tpu_custom_call.1} parent=11 // pred_check_branch
          %261 = sbr.rel (%p259) target = $region24
        $region23: #{tpu_custom_call.1} parent=11 // pred_region
          _
        $region24: #{tpu_custom_call.1} parent=11 // pred_fallthru
          _
        // Predicated region
        $region25: #{tpu_custom_call.1} parent=11 // pred_check
          %p262 = pneg %p128
        $region26: #{tpu_custom_call.1} parent=11 // pred_check_branch
          %264 = sbr.rel (%p262) target = $region28
        $region27: #{tpu_custom_call.1} parent=11 // pred_region
          _
        $region28: #{tpu_custom_call.1} parent=11 // pred_fallthru
          _
        // Predicated region
        $region29: #{tpu_custom_call.1} parent=11 // pred_check
          %p265 = pneg %p149
        $region30: #{tpu_custom_call.1} parent=11 // pred_check_branch
          %267 = sbr.rel (%p265) target = $region32
        $region31: #{tpu_custom_call.1} parent=11 // pred_region
          _
        $region32: #{tpu_custom_call.1} parent=11 // pred_fallthru
          _
        // Predicated region
        $region33: #{tpu_custom_call.1} parent=11 // pred_check
          %p268 = pneg %p170
        $region34: #{tpu_custom_call.1} parent=11 // pred_check_branch
          %270 = sbr.rel (%p268) target = $region36
        $region35: #{tpu_custom_call.1} parent=11 // pred_region
          _
        $region36: #{tpu_custom_call.1} parent=11 // pred_fallthru
          _
        // Predicated region
        $region37: #{tpu_custom_call.1} parent=11 // pred_check
          %p271 = pneg %p191
        $region38: #{tpu_custom_call.1} parent=11 // pred_check_branch
          %273 = sbr.rel (%p271) target = $region40
        $region39: #{tpu_custom_call.1} parent=11 // pred_region
          _
        $region40: #{tpu_custom_call.1} parent=11 // pred_fallthru
          _
        // Predicated region
        $region41: #{tpu_custom_call.1} parent=11 // pred_check
          %p274 = pneg %p212
        $region42: #{tpu_custom_call.1} parent=11 // pred_check_branch
          %276 = sbr.rel (%p274) target = $region44
        $region43: #{tpu_custom_call.1} parent=11 // pred_region
          _
        $region44: #{tpu_custom_call.1} parent=11 // pred_fallthru
          _
      $region12: #{tpu_custom_call.1} parent=5 // pred_fallthru
        _
      %p277 = scmp.lt.s32.totalorder %s18, 2
      // Predicated region
      $region45: #{tpu_custom_call.1} parent=5 // pred_check
        %p278 = pneg %p277
      $region46: #{tpu_custom_call.1} parent=5 // pred_check_branch
        %280 = sbr.rel (%p278) target = $region48
      $region47: #{tpu_custom_call.1} parent=5 // pred_region
        // Predicated region
        $region49: #{tpu_custom_call.1} parent=47 // pred_check
          %p281 = pneg %p38
        $region50: #{tpu_custom_call.1} parent=47 // pred_check_branch
          %283 = sbr.rel (%p281) target = $region52
        $region51: #{tpu_custom_call.1} parent=47 // pred_region
          %p284 = scmp.lt.s32.totalorder %s18, 1
          %s285 = scalar_select %p284, %s18, 1
          %s286 = smul.addr %s285, 16
          %s287 = smul.addr %s286, 8
          %s288 = scalar_lea.vmem %s0, %s287
        $region52: #{tpu_custom_call.1} parent=47 // pred_fallthru
          _
      $region48: #{tpu_custom_call.1} parent=5 // pred_fallthru
        _
      %p289 = scmp.le.s32.totalorder 1, %s18
      %p290 = scmp.lt.s32.totalorder %s18, 3
      %p291 = pnand %p289, %p290
      %p292 = pneg %p291
      // Predicated region
      $region53: #{tpu_custom_call.1} parent=5 // pred_check
        _
      $region54: #{tpu_custom_call.1} parent=5 // pred_check_branch
        %294 = sbr.rel (%p291) target = $region56
      $region55: #{tpu_custom_call.1} parent=5 // pred_region
        %s295 = ssub.s32 %s18, 1
        %p296 = scmp.lt.s32.totalorder %s23, 1
        %s297 = scalar_select %p296, %s23, 1
        %s298 = smul.addr %s297, 16
        %s299 = smul.addr %s298, 8
        %s300 = scalar_lea.vmem %s0, %s299
        %p301 = pneg %p44
        %p302 = pneg %p41
        %p303 = pneg %p65
        %p304 = pneg %p62
        %p305 = pneg %p86
        %p306 = pneg %p83
        %p307 = pneg %p107
        %p308 = pneg %p104
        %p309 = pneg %p128
        %p310 = pneg %p125
        %p311 = pneg %p149
        %p312 = pneg %p146
        %p313 = pneg %p170
        %p314 = pneg %p167
        %p315 = pneg %p191
        %p316 = pneg %p188
        %p317 = pneg %p212
        %p318 = pneg %p209
        %p319 = pneg %p238
        %p320 = pneg %p235
        %s321 = sand.u32 %s225, 1
        %s322 = scalar_lea.sflag [#allocation5], %s321
        %s323 = sand.u32 %s225, 1
        %s324 = smul.addr %s323, 128
        %s325 = scalar_lea.vmem [#allocation4], %s324
        %p326 = scmp.lt.s32.totalorder %s23, 1
        %s327 = scalar_select %p326, %s23, 1
        %s328 = smul.addr %s327, 16
        %s329 = smul.addr %s328, 8
        %s330 = scalar_lea.vmem %s0, %s329
        %v332 = vld [vmem:[%s330] sm:$0xff]
        %v333 = vld [vmem:[%s330 + $0x8] sm:$0xff]
        %v334 = vld [vmem:[%s330 + $0x10] sm:$0xff]
        %v335 = vld [vmem:[%s330 + $0x18] sm:$0xff]
        %v336 = vld [vmem:[%s330 + $0x20] sm:$0xff]
        %v337 = vld [vmem:[%s330 + $0x28] sm:$0xff]
        %v338 = vld [vmem:[%s330 + $0x30] sm:$0xff]
        %v339 = vld [vmem:[%s330 + $0x38] sm:$0xff]
        %v340 = vld [vmem:[%s330 + $0x40] sm:$0xff]
        %v341 = vld [vmem:[%s330 + $0x48] sm:$0xff]
        %v342 = vld [vmem:[%s330 + $0x50] sm:$0xff]
        %v343 = vld [vmem:[%s330 + $0x58] sm:$0xff]
        %v344 = vld [vmem:[%s330 + $0x60] sm:$0xff]
        %v345 = vld [vmem:[%s330 + $0x68] sm:$0xff]
        %v346 = vld [vmem:[%s330 + $0x70] sm:$0xff]
        %v347 = vld [vmem:[%s330 + $0x78] sm:$0xff]
        %v348 = vadd.f32 %v332, %v333
        %349 = vadd.xlane.f32.xlu0 %v348
        %v350 = vpop.xlane.xlu0 %349
        %v351 = vadd.f32 %v334, %v335
        %352 = vadd.xlane.f32.xlu0 %v351
        %v353 = vpop.xlane.xlu0 %352
        %v354 = vadd.f32 %v336, %v337
        %355 = vadd.xlane.f32.xlu0 %v354
        %v356 = vpop.xlane.xlu0 %355
        %v357 = vadd.f32 %v338, %v339
        %358 = vadd.xlane.f32.xlu0 %v357
        %v359 = vpop.xlane.xlu0 %358
        %v360 = vadd.f32 %v340, %v341
        %361 = vadd.xlane.f32.xlu0 %v360
        %v362 = vpop.xlane.xlu0 %361
        %v363 = vadd.f32 %v342, %v343
        %364 = vadd.xlane.f32.xlu0 %v363
        %v365 = vpop.xlane.xlu0 %364
        %v366 = vadd.f32 %v344, %v345
        %367 = vadd.xlane.f32.xlu0 %v366
        %v368 = vpop.xlane.xlu0 %367
        %v369 = vadd.f32 %v346, %v347
        %370 = vadd.xlane.f32.xlu0 %v369
        %v371 = vpop.xlane.xlu0 %370
        %v372 = vld [vmem:[%s1] sm:$0xff]
        %v373 = vld [vmem:[%s1 + $0x8] sm:$0xff]
        %v374 = vld [vmem:[%s1 + $0x10] sm:$0xff]
        %v375 = vld [vmem:[%s1 + $0x18] sm:$0xff]
        %vm376 = vcmask 523264
        %v378 = vsel %vm376, %v372, 0
        %v381 = vsel %vm376, %v373, 0
        %v384 = vsel %vm376, %v374, 0
        %v387 = vsel %vm376, %v375, 0
        %389 = vmatprep.subr.mxu0 0.0
        %390 = vmatpush1.msra.mxu0 %v350
        %391 = vmatprep.subr.mxu0 0.0
        %392 = vmatpush1.msra.mxu0 %v353
        %393 = vmatprep.subr.mxu0 0.0
        %394 = vmatpush1.msra.mxu0 %v356
        %395 = vmatprep.subr.mxu0 0.0
        %396 = vmatpush1.msra.mxu0 %v359
        %397 = vmatprep.subr.mxu0 0.0
        %398 = vmatpush1.msra.mxu0 %v362
        %399 = vmatprep.subr.mxu0 0.0
        %400 = vmatpush1.msra.mxu0 %v365
        %401 = vmatprep.subr.mxu0 0.0
        %402 = vmatpush1.msra.mxu0 %v368
        %403 = vmatprep.subr.mxu0 0.0
        %404 = vmatpush1.msra.mxu0 %v371
        %405 = vmatprep.subr.mxu0 0.0
        %406 = vmatpush1.msra.mxu0 0.0
        %407 = vmatprep.subr.mxu0 0.0
        %408 = vmatpush1.msra.mxu0 0.0
        %409 = vmatprep.subr.mxu0 0.0
        %410 = vmatpush1.msra.mxu0 0.0
        %411 = vmatprep.subr.mxu0 0.0
        %412 = vmatpush1.msra.mxu0 0.0
        %413 = vmatprep.subr.mxu0 0.0
        %414 = vmatpush1.msra.mxu0 0.0
        %415 = vmatprep.subr.mxu0 0.0
        %416 = vmatpush1.msra.mxu0 0.0
        %417 = vmatprep.subr.mxu0 0.0
        %418 = vmatpush1.msra.mxu0 0.0
        %419 = vmatprep.subr.mxu0 0.0
        %420 = vmatpush1.msra.mxu0 0.0
        %421 = vmatprep.subr.mxu0 0.0
        %422 = vmatpush1.msra.mxu0 0.0
        %423 = vmatprep.subr.mxu0 0.0
        %424 = vmatpush1.msra.mxu0 0.0
        %425 = vmatprep.subr.mxu0 0.0
        %426 = vmatpush1.msra.mxu0 0.0
        %427 = vmatprep.subr.mxu0 0.0
        %428 = vmatpush1.msra.mxu0 0.0
        %429 = vmatprep.subr.mxu0 0.0
        %430 = vmatpush1.msra.mxu0 0.0
        %431 = vmatprep.subr.mxu0 0.0
        %432 = vmatpush1.msra.mxu0 0.0
        %433 = vmatprep.subr.mxu0 0.0
        %434 = vmatpush1.msra.mxu0 0.0
        %435 = vmatprep.subr.mxu0 0.0
        %436 = vmatpush1.msra.mxu0 0.0
        %437 = vmatprep.subr.mxu0 0.0
        %438 = vmatpush1.msra.mxu0 0.0
        %439 = vmatprep.subr.mxu0 0.0
        %440 = vmatpush1.msra.mxu0 0.0
        %441 = vmatprep.subr.mxu0 0.0
        %442 = vmatpush1.msra.mxu0 0.0
        %443 = vmatprep.subr.mxu0 0.0
        %444 = vmatpush1.msra.mxu0 0.0
        %445 = vmatprep.subr.mxu0 0.0
        %446 = vmatpush1.msra.mxu0 0.0
        %447 = vmatprep.subr.mxu0 0.0
        %448 = vmatpush1.msra.mxu0 0.0
        %449 = vmatprep.subr.mxu0 0.0
        %450 = vmatpush1.msra.mxu0 0.0
        %451 = vmatprep.subr.mxu0 0.0
        %452 = vmatpush1.msra.mxu0 0.0
        %453 = vmatprep.mubr.f32.mxu0 0.0
        %454 = vmatmul.mubr.f32.gmra.mrb[0].mxu0 %v378
        %v455 = vpop.f32.mrb[0].mxu0
        %v456 = vadd.f32 0.0, %v455
        %v457 = vpop.f32.mrb[0].mxu0
        %458 = vmatprep.mubr.f32.mxu0 0.0
        %459 = vmatmul.mubr.f32.gmra.mrb[0].mxu0 %v381
        %v460 = vpop.f32.mrb[0].mxu0
        %v461 = vadd.f32 0.0, %v460
        %v462 = vpop.f32.mrb[0].mxu0
        %463 = vmatprep.mubr.f32.mxu0 0.0
        %464 = vmatmul.mubr.f32.gmra.mrb[0].mxu0 %v384
        %v465 = vpop.f32.mrb[0].mxu0
        %v466 = vadd.f32 0.0, %v465
        %v467 = vpop.f32.mrb[0].mxu0
        %468 = vmatprep.mubr.f32.mxu0 0.0
        %469 = vmatmul.mubr.f32.gmra.mrb[0].mxu0 %v387
        %v470 = vpop.f32.mrb[0].mxu0
        %v471 = vadd.f32 0.0, %v470
        %v472 = vpop.f32.mrb[0].mxu0
        %473 = vdwg.mxu0
        %v474 = vmul.f32 %v456, 0.001953125
        %v475 = vmul.f32 %v461, 0.001953125
        %v476 = vmul.f32 %v466, 0.001953125
        %v477 = vmul.f32 %v471, 0.001953125
        %v478 = vld [vmem:[%s2] sm:$0xff]
        %v479 = vld [vmem:[%s2 + $0x8] sm:$0xff]
        %v480 = vld [vmem:[%s2 + $0x10] sm:$0xff]
        %v481 = vld [vmem:[%s2 + $0x18] sm:$0xff]
        %v482 = vld [vmem:[%s2 + $0x20] sm:$0xff]
        %v483 = vld [vmem:[%s2 + $0x28] sm:$0xff]
        %v484 = vld [vmem:[%s2 + $0x30] sm:$0xff]
        %v485 = vld [vmem:[%s2 + $0x38] sm:$0xff]
        %vm486 = vcmask 261120
        %v488 = vsel %vm486, %v478, 0
        %v491 = vsel %vm486, %v479, 0
        %v494 = vsel %vm486, %v480, 0
        %v497 = vsel %vm486, %v481, 0
        %v500 = vsel %vm486, %v482, 0
        %v503 = vsel %vm486, %v483, 0
        %v506 = vsel %vm486, %v484, 0
        %v509 = vsel %vm486, %v485, 0
        %511 = vmatprep.subr.mxu0 0.0
        %512 = vmatpush1.msra.mxu0 %v474
        %513 = vmatprep.subr.mxu0 0.0
        %514 = vmatpush1.msra.mxu0 %v475
        %515 = vmatprep.subr.mxu0 0.0
        %516 = vmatpush1.msra.mxu0 %v476
        %517 = vmatprep.subr.mxu0 0.0
        %518 = vmatpush1.msra.mxu0 %v477
        %519 = vmatprep.subr.mxu0 0.0
        %520 = vmatpush1.msra.mxu0 0.0
        %521 = vmatprep.subr.mxu0 0.0
        %522 = vmatpush1.msra.mxu0 0.0
        %523 = vmatprep.subr.mxu0 0.0
        %524 = vmatpush1.msra.mxu0 0.0
        %525 = vmatprep.subr.mxu0 0.0
        %526 = vmatpush1.msra.mxu0 0.0
        %527 = vmatprep.subr.mxu0 0.0
        %528 = vmatpush1.msra.mxu0 0.0
        %529 = vmatprep.subr.mxu0 0.0
        %530 = vmatpush1.msra.mxu0 0.0
        %531 = vmatprep.subr.mxu0 0.0
        %532 = vmatpush1.msra.mxu0 0.0
        %533 = vmatprep.subr.mxu0 0.0
        %534 = vmatpush1.msra.mxu0 0.0
        %535 = vmatprep.subr.mxu0 0.0
        %536 = vmatpush1.msra.mxu0 0.0
        %537 = vmatprep.subr.mxu0 0.0
        %538 = vmatpush1.msra.mxu0 0.0
        %539 = vmatprep.subr.mxu0 0.0
        %540 = vmatpush1.msra.mxu0 0.0
        %541 = vmatprep.subr.mxu0 0.0
        %542 = vmatpush1.msra.mxu0 0.0
        %543 = vmatprep.subr.mxu0 0.0
        %544 = vmatpush1.msra.mxu0 0.0
        %545 = vmatprep.subr.mxu0 0.0
        %546 = vmatpush1.msra.mxu0 0.0
        %547 = vmatprep.subr.mxu0 0.0
        %548 = vmatpush1.msra.mxu0 0.0
        %549 = vmatprep.subr.mxu0 0.0
        %550 = vmatpush1.msra.mxu0 0.0
        %551 = vmatprep.subr.mxu0 0.0
        %552 = vmatpush1.msra.mxu0 0.0
        %553 = vmatprep.subr.mxu0 0.0
        %554 = vmatpush1.msra.mxu0 0.0
        %555 = vmatprep.subr.mxu0 0.0
        %556 = vmatpush1.msra.mxu0 0.0
        %557 = vmatprep.subr.mxu0 0.0
        %558 = vmatpush1.msra.mxu0 0.0
        %559 = vmatprep.subr.mxu0 0.0
        %560 = vmatpush1.msra.mxu0 0.0
        %561 = vmatprep.subr.mxu0 0.0
        %562 = vmatpush1.msra.mxu0 0.0
        %563 = vmatprep.subr.mxu0 0.0
        %564 = vmatpush1.msra.mxu0 0.0
        %565 = vmatprep.subr.mxu0 0.0
        %566 = vmatpush1.msra.mxu0 0.0
        %567 = vmatprep.subr.mxu0 0.0
        %568 = vmatpush1.msra.mxu0 0.0
        %569 = vmatprep.subr.mxu0 0.0
        %570 = vmatpush1.msra.mxu0 0.0
        %571 = vmatprep.subr.mxu0 0.0
        %572 = vmatpush1.msra.mxu0 0.0
        %573 = vmatprep.subr.mxu0 0.0
        %574 = vmatpush1.msra.mxu0 0.0
        %575 = vmatprep.mubr.f32.mxu0 0.0
        %576 = vmatmul.mubr.f32.gmra.mrb[0].mxu0 %v488
        %v577 = vpop.f32.mrb[0].mxu0
        %v578 = vadd.f32 0.0, %v577
        %v579 = vpop.f32.mrb[0].mxu0
        %580 = vmatprep.mubr.f32.mxu0 0.0
        %581 = vmatmul.mubr.f32.gmra.mrb[0].mxu0 %v491
        %v582 = vpop.f32.mrb[0].mxu0
        %v583 = vadd.f32 0.0, %v582
        %v584 = vpop.f32.mrb[0].mxu0
        %585 = vmatprep.mubr.f32.mxu0 0.0
        %586 = vmatmul.mubr.f32.gmra.mrb[0].mxu0 %v494
        %v587 = vpop.f32.mrb[0].mxu0
        %v588 = vadd.f32 0.0, %v587
        %v589 = vpop.f32.mrb[0].mxu0
        %590 = vmatprep.mubr.f32.mxu0 0.0
        %591 = vmatmul.mubr.f32.gmra.mrb[0].mxu0 %v497
        %v592 = vpop.f32.mrb[0].mxu0
        %v593 = vadd.f32 0.0, %v592
        %v594 = vpop.f32.mrb[0].mxu0
        %595 = vmatprep.mubr.f32.mxu0 0.0
        %596 = vmatmul.mubr.f32.gmra.mrb[0].mxu0 %v500
        %v597 = vpop.f32.mrb[0].mxu0
        %v598 = vadd.f32 0.0, %v597
        %v599 = vpop.f32.mrb[0].mxu0
        %600 = vmatprep.mubr.f32.mxu0 0.0
        %601 = vmatmul.mubr.f32.gmra.mrb[0].mxu0 %v503
        %v602 = vpop.f32.mrb[0].mxu0
        %v603 = vadd.f32 0.0, %v602
        %v604 = vpop.f32.mrb[0].mxu0
        %605 = vmatprep.mubr.f32.mxu0 0.0
        %606 = vmatmul.mubr.f32.gmra.mrb[0].mxu0 %v506
        %v607 = vpop.f32.mrb[0].mxu0
        %v608 = vadd.f32 0.0, %v607
        %v609 = vpop.f32.mrb[0].mxu0
        %610 = vmatprep.mubr.f32.mxu0 0.0
        %611 = vmatmul.mubr.f32.gmra.mrb[0].mxu0 %v509
        %v612 = vpop.f32.mrb[0].mxu0
        %v613 = vadd.f32 0.0, %v612
        %v614 = vpop.f32.mrb[0].mxu0
        %615 = vdwg.mxu0
        %617 = vset.pattern.permute.xlu0 0
        %618 = vperm.xlu0 %617, %v578
        %v619 = vpop.permute.xlu0 %618
        %622 = vset.pattern.permute.xlu0 0
        %623 = vperm.xlu0 %622, %v583
        %v624 = vpop.permute.xlu0 %623
        %627 = vset.pattern.permute.xlu0 0
        %628 = vperm.xlu0 %627, %v588
        %v629 = vpop.permute.xlu0 %628
        %632 = vset.pattern.permute.xlu0 0
        %633 = vperm.xlu0 %632, %v593
        %v634 = vpop.permute.xlu0 %633
        %637 = vset.pattern.permute.xlu0 0
        %638 = vperm.xlu0 %637, %v598
        %v639 = vpop.permute.xlu0 %638
        %642 = vset.pattern.permute.xlu0 0
        %643 = vperm.xlu0 %642, %v603
        %v644 = vpop.permute.xlu0 %643
        %647 = vset.pattern.permute.xlu0 0
        %648 = vperm.xlu0 %647, %v608
        %v649 = vpop.permute.xlu0 %648
        %652 = vset.pattern.permute.xlu0 0
        %653 = vperm.xlu0 %652, %v613
        %v654 = vpop.permute.xlu0 %653
        %v656 = vsub.f32 %v332, %v619
        %v657 = vsub.f32 %v333, %v619
        %v658 = vsub.f32 %v334, %v624
        %v659 = vsub.f32 %v335, %v624
        %v660 = vsub.f32 %v336, %v629
        %v661 = vsub.f32 %v337, %v629
        %v662 = vsub.f32 %v338, %v634
        %v663 = vsub.f32 %v339, %v634
        %v664 = vsub.f32 %v340, %v639
        %v665 = vsub.f32 %v341, %v639
        %v666 = vsub.f32 %v342, %v644
        %v667 = vsub.f32 %v343, %v644
        %v668 = vsub.f32 %v344, %v649
        %v669 = vsub.f32 %v345, %v649
        %v670 = vsub.f32 %v346, %v654
        %v671 = vsub.f32 %v347, %v654
        %v672 = vmul.f32 %v656, %v656
        %v673 = vmul.f32 %v657, %v657
        %v674 = vmul.f32 %v658, %v658
        %v675 = vmul.f32 %v659, %v659
        %v676 = vmul.f32 %v660, %v660
        %v677 = vmul.f32 %v661, %v661
        %v678 = vmul.f32 %v662, %v662
        %v679 = vmul.f32 %v663, %v663
        %v680 = vmul.f32 %v664, %v664
        %v681 = vmul.f32 %v665, %v665
        %v682 = vmul.f32 %v666, %v666
        %v683 = vmul.f32 %v667, %v667
        %v684 = vmul.f32 %v668, %v668
        %v685 = vmul.f32 %v669, %v669
        %v686 = vmul.f32 %v670, %v670
        %v687 = vmul.f32 %v671, %v671
        %v688 = vadd.f32 %v672, %v673
        %689 = vadd.xlane.f32.xlu0 %v688
        %v690 = vpop.xlane.xlu0 %689
        %v691 = vadd.f32 %v674, %v675
        %692 = vadd.xlane.f32.xlu0 %v691
        %v693 = vpop.xlane.xlu0 %692
        %v694 = vadd.f32 %v676, %v677
        %695 = vadd.xlane.f32.xlu0 %v694
        %v696 = vpop.xlane.xlu0 %695
        %v697 = vadd.f32 %v678, %v679
        %698 = vadd.xlane.f32.xlu0 %v697
        %v699 = vpop.xlane.xlu0 %698
        %v700 = vadd.f32 %v680, %v681
        %701 = vadd.xlane.f32.xlu0 %v700
        %v702 = vpop.xlane.xlu0 %701
        %v703 = vadd.f32 %v682, %v683
        %704 = vadd.xlane.f32.xlu0 %v703
        %v705 = vpop.xlane.xlu0 %704
        %v706 = vadd.f32 %v684, %v685
        %707 = vadd.xlane.f32.xlu0 %v706
        %v708 = vpop.xlane.xlu0 %707
        %v709 = vadd.f32 %v686, %v687
        %710 = vadd.xlane.f32.xlu0 %v709
        %v711 = vpop.xlane.xlu0 %710
        %712 = vmatprep.subr.mxu0 0.0
        %713 = vmatpush1.msra.mxu0 %v690
        %714 = vmatprep.subr.mxu0 0.0
        %715 = vmatpush1.msra.mxu0 %v693
        %716 = vmatprep.subr.mxu0 0.0
        %717 = vmatpush1.msra.mxu0 %v696
        %718 = vmatprep.subr.mxu0 0.0
        %719 = vmatpush1.msra.mxu0 %v699
        %720 = vmatprep.subr.mxu0 0.0
        %721 = vmatpush1.msra.mxu0 %v702
        %722 = vmatprep.subr.mxu0 0.0
        %723 = vmatpush1.msra.mxu0 %v705
        %724 = vmatprep.subr.mxu0 0.0
        %725 = vmatpush1.msra.mxu0 %v708
        %726 = vmatprep.subr.mxu0 0.0
        %727 = vmatpush1.msra.mxu0 %v711
        %728 = vmatprep.subr.mxu0 0.0
        %729 = vmatpush1.msra.mxu0 0.0
        %730 = vmatprep.subr.mxu0 0.0
        %731 = vmatpush1.msra.mxu0 0.0
        %732 = vmatprep.subr.mxu0 0.0
        %733 = vmatpush1.msra.mxu0 0.0
        %734 = vmatprep.subr.mxu0 0.0
        %735 = vmatpush1.msra.mxu0 0.0
        %736 = vmatprep.subr.mxu0 0.0
        %737 = vmatpush1.msra.mxu0 0.0
        %738 = vmatprep.subr.mxu0 0.0
        %739 = vmatpush1.msra.mxu0 0.0
        %740 = vmatprep.subr.mxu0 0.0
        %741 = vmatpush1.msra.mxu0 0.0
        %742 = vmatprep.subr.mxu0 0.0
        %743 = vmatpush1.msra.mxu0 0.0
        %744 = vmatprep.subr.mxu0 0.0
        %745 = vmatpush1.msra.mxu0 0.0
        %746 = vmatprep.subr.mxu0 0.0
        %747 = vmatpush1.msra.mxu0 0.0
        %748 = vmatprep.subr.mxu0 0.0
        %749 = vmatpush1.msra.mxu0 0.0
        %750 = vmatprep.subr.mxu0 0.0
        %751 = vmatpush1.msra.mxu0 0.0
        %752 = vmatprep.subr.mxu0 0.0
        %753 = vmatpush1.msra.mxu0 0.0
        %754 = vmatprep.subr.mxu0 0.0
        %755 = vmatpush1.msra.mxu0 0.0
        %756 = vmatprep.subr.mxu0 0.0
        %757 = vmatpush1.msra.mxu0 0.0
        %758 = vmatprep.subr.mxu0 0.0
        %759 = vmatpush1.msra.mxu0 0.0
        %760 = vmatprep.subr.mxu0 0.0
        %761 = vmatpush1.msra.mxu0 0.0
        %762 = vmatprep.subr.mxu0 0.0
        %763 = vmatpush1.msra.mxu0 0.0
        %764 = vmatprep.subr.mxu0 0.0
        %765 = vmatpush1.msra.mxu0 0.0
        %766 = vmatprep.subr.mxu0 0.0
        %767 = vmatpush1.msra.mxu0 0.0
        %768 = vmatprep.subr.mxu0 0.0
        %769 = vmatpush1.msra.mxu0 0.0
        %770 = vmatprep.subr.mxu0 0.0
        %771 = vmatpush1.msra.mxu0 0.0
        %772 = vmatprep.subr.mxu0 0.0
        %773 = vmatpush1.msra.mxu0 0.0
        %774 = vmatprep.subr.mxu0 0.0
        %775 = vmatpush1.msra.mxu0 0.0
        %776 = vmatprep.mubr.f32.mxu0 0.0
        %777 = vmatmul.mubr.f32.gmra.mrb[0].mxu0 %v378
        %v778 = vpop.f32.mrb[0].mxu0
        %v779 = vadd.f32 0.0, %v778
        %v780 = vpop.f32.mrb[0].mxu0
        %781 = vmatprep.mubr.f32.mxu0 0.0
        %782 = vmatmul.mubr.f32.gmra.mrb[0].mxu0 %v381
        %v783 = vpop.f32.mrb[0].mxu0
        %v784 = vadd.f32 0.0, %v783
        %v785 = vpop.f32.mrb[0].mxu0
        %786 = vmatprep.mubr.f32.mxu0 0.0
        %787 = vmatmul.mubr.f32.gmra.mrb[0].mxu0 %v384
        %v788 = vpop.f32.mrb[0].mxu0
        %v789 = vadd.f32 0.0, %v788
        %v790 = vpop.f32.mrb[0].mxu0
        %791 = vmatprep.mubr.f32.mxu0 0.0
        %792 = vmatmul.mubr.f32.gmra.mrb[0].mxu0 %v387
        %v793 = vpop.f32.mrb[0].mxu0
        %v794 = vadd.f32 0.0, %v793
        %v795 = vpop.f32.mrb[0].mxu0
        %796 = vdwg.mxu0
        %v797 = vmul.f32 %v779, 0.001953125
        %v798 = vmul.f32 %v784, 0.001953125
        %v799 = vmul.f32 %v789, 0.001953125
        %v800 = vmul.f32 %v794, 0.001953125
        %v801 = vadd.f32 %v797, 1e-05
        %v802 = vadd.f32 %v798, 1e-05
        %v803 = vadd.f32 %v799, 1e-05
        %v804 = vadd.f32 %v800, 1e-05
        %v805 = vrsqrt.pop %v801
        %v806 = vrsqrt.pop %v802
        %v807 = vrsqrt.pop %v803
        %v808 = vrsqrt.pop %v804
        %809 = vmatprep.subr.mxu0 0.0
        %810 = vmatpush1.msra.mxu0 %v805
        %811 = vmatprep.subr.mxu0 0.0
        %812 = vmatpush1.msra.mxu0 %v806
        %813 = vmatprep.subr.mxu0 0.0
        %814 = vmatpush1.msra.mxu0 %v807
        %815 = vmatprep.subr.mxu0 0.0
        %816 = vmatpush1.msra.mxu0 %v808
        %817 = vmatprep.subr.mxu0 0.0
        %818 = vmatpush1.msra.mxu0 0.0
        %819 = vmatprep.subr.mxu0 0.0
        %820 = vmatpush1.msra.mxu0 0.0
        %821 = vmatprep.subr.mxu0 0.0
        %822 = vmatpush1.msra.mxu0 0.0
        %823 = vmatprep.subr.mxu0 0.0
        %824 = vmatpush1.msra.mxu0 0.0
        %825 = vmatprep.subr.mxu0 0.0
        %826 = vmatpush1.msra.mxu0 0.0
        %827 = vmatprep.subr.mxu0 0.0
        %828 = vmatpush1.msra.mxu0 0.0
        %829 = vmatprep.subr.mxu0 0.0
        %830 = vmatpush1.msra.mxu0 0.0
        %831 = vmatprep.subr.mxu0 0.0
        %832 = vmatpush1.msra.mxu0 0.0
        %833 = vmatprep.subr.mxu0 0.0
        %834 = vmatpush1.msra.mxu0 0.0
        %835 = vmatprep.subr.mxu0 0.0
        %836 = vmatpush1.msra.mxu0 0.0
        %837 = vmatprep.subr.mxu0 0.0
        %838 = vmatpush1.msra.mxu0 0.0
        %839 = vmatprep.subr.mxu0 0.0
        %840 = vmatpush1.msra.mxu0 0.0
        %841 = vmatprep.subr.mxu0 0.0
        %842 = vmatpush1.msra.mxu0 0.0
        %843 = vmatprep.subr.mxu0 0.0
        %844 = vmatpush1.msra.mxu0 0.0
        %845 = vmatprep.subr.mxu0 0.0
        %846 = vmatpush1.msra.mxu0 0.0
        %847 = vmatprep.subr.mxu0 0.0
        %848 = vmatpush1.msra.mxu0 0.0
        %849 = vmatprep.subr.mxu0 0.0
        %850 = vmatpush1.msra.mxu0 0.0
        %851 = vmatprep.subr.mxu0 0.0
        %852 = vmatpush1.msra.mxu0 0.0
        %853 = vmatprep.subr.mxu0 0.0
        %854 = vmatpush1.msra.mxu0 0.0
        %855 = vmatprep.subr.mxu0 0.0
        %856 = vmatpush1.msra.mxu0 0.0
        %857 = vmatprep.subr.mxu0 0.0
        %858 = vmatpush1.msra.mxu0 0.0
        %859 = vmatprep.subr.mxu0 0.0
        %860 = vmatpush1.msra.mxu0 0.0
        %861 = vmatprep.subr.mxu0 0.0
        %862 = vmatpush1.msra.mxu0 0.0
        %863 = vmatprep.subr.mxu0 0.0
        %864 = vmatpush1.msra.mxu0 0.0
        %865 = vmatprep.subr.mxu0 0.0
        %866 = vmatpush1.msra.mxu0 0.0
        %867 = vmatprep.subr.mxu0 0.0
        %868 = vmatpush1.msra.mxu0 0.0
        %869 = vmatprep.subr.mxu0 0.0
        %870 = vmatpush1.msra.mxu0 0.0
        %871 = vmatprep.subr.mxu0 0.0
        %872 = vmatpush1.msra.mxu0 0.0
        %873 = vmatprep.mubr.f32.mxu0 0.0
        %874 = vmatmul.mubr.f32.gmra.mrb[0].mxu0 %v488
        %v875 = vpop.f32.mrb[0].mxu0
        %v876 = vadd.f32 0.0, %v875
        %v877 = vpop.f32.mrb[0].mxu0
        %878 = vmatprep.mubr.f32.mxu0 0.0
        %879 = vmatmul.mubr.f32.gmra.mrb[0].mxu0 %v491
        %v880 = vpop.f32.mrb[0].mxu0
        %v881 = vadd.f32 0.0, %v880
        %v882 = vpop.f32.mrb[0].mxu0
        %883 = vmatprep.mubr.f32.mxu0 0.0
        %884 = vmatmul.mubr.f32.gmra.mrb[0].mxu0 %v494
        %v885 = vpop.f32.mrb[0].mxu0
        %v886 = vadd.f32 0.0, %v885
        %v887 = vpop.f32.mrb[0].mxu0
        %888 = vmatprep.mubr.f32.mxu0 0.0
        %889 = vmatmul.mubr.f32.gmra.mrb[0].mxu0 %v497
        %v890 = vpop.f32.mrb[0].mxu0
        %v891 = vadd.f32 0.0, %v890
        %v892 = vpop.f32.mrb[0].mxu0
        %893 = vmatprep.mubr.f32.mxu0 0.0
        %894 = vmatmul.mubr.f32.gmra.mrb[0].mxu0 %v500
        %v895 = vpop.f32.mrb[0].mxu0
        %v896 = vadd.f32 0.0, %v895
        %v897 = vpop.f32.mrb[0].mxu0
        %898 = vmatprep.mubr.f32.mxu0 0.0
        %899 = vmatmul.mubr.f32.gmra.mrb[0].mxu0 %v503
        %v900 = vpop.f32.mrb[0].mxu0
        %v901 = vadd.f32 0.0, %v900
        %v902 = vpop.f32.mrb[0].mxu0
        %903 = vmatprep.mubr.f32.mxu0 0.0
        %904 = vmatmul.mubr.f32.gmra.mrb[0].mxu0 %v506
        %v905 = vpop.f32.mrb[0].mxu0
        %v906 = vadd.f32 0.0, %v905
        %v907 = vpop.f32.mrb[0].mxu0
        %908 = vmatprep.mubr.f32.mxu0 0.0
        %909 = vmatmul.mubr.f32.gmra.mrb[0].mxu0 %v509
        %v910 = vpop.f32.mrb[0].mxu0
        %v911 = vadd.f32 0.0, %v910
        %v912 = vpop.f32.mrb[0].mxu0
        %913 = vdwg.mxu0
        %v914 = vld [vmem:[%s3] sm:$0xff]
        %v915 = vld [vmem:[%s3 + $0x8] sm:$0xff]
        %v916 = vld [vmem:[%s3 + $0x10] sm:$0xff]
        %v917 = vld [vmem:[%s3 + $0x18] sm:$0xff]
        %v918 = vld [vmem:[%s3 + $0x20] sm:$0xff]
        %v919 = vld [vmem:[%s3 + $0x28] sm:$0xff]
        %v920 = vld [vmem:[%s3 + $0x30] sm:$0xff]
        %v921 = vld [vmem:[%s3 + $0x38] sm:$0xff]
        %v922 = vmul.f32 %v914, %v876
        %v923 = vmul.f32 %v915, %v881
        %v924 = vmul.f32 %v916, %v886
        %v925 = vmul.f32 %v917, %v891
        %v926 = vmul.f32 %v918, %v896
        %v927 = vmul.f32 %v919, %v901
        %v928 = vmul.f32 %v920, %v906
        %v929 = vmul.f32 %v921, %v911
        %931 = vset.pattern.permute.xlu0 0
        %932 = vperm.xlu0 %931, %v922
        %v933 = vpop.permute.xlu0 %932
        %936 = vset.pattern.permute.xlu0 0
        %937 = vperm.xlu0 %936, %v923
        %v938 = vpop.permute.xlu0 %937
        %941 = vset.pattern.permute.xlu0 0
        %942 = vperm.xlu0 %941, %v924
        %v943 = vpop.permute.xlu0 %942
        %946 = vset.pattern.permute.xlu0 0
        %947 = vperm.xlu0 %946, %v925
        %v948 = vpop.permute.xlu0 %947
        %951 = vset.pattern.permute.xlu0 0
        %952 = vperm.xlu0 %951, %v926
        %v953 = vpop.permute.xlu0 %952
        %956 = vset.pattern.permute.xlu0 0
        %957 = vperm.xlu0 %956, %v927
        %v958 = vpop.permute.xlu0 %957
        %961 = vset.pattern.permute.xlu0 0
        %962 = vperm.xlu0 %961, %v928
        %v963 = vpop.permute.xlu0 %962
        %966 = vset.pattern.permute.xlu0 0
        %967 = vperm.xlu0 %966, %v929
        %v968 = vpop.permute.xlu0 %967
        %v970 = vmul.f32 %v656, %v933
        %v971 = vmul.f32 %v657, %v933
        %v972 = vmul.f32 %v658, %v938
        %v973 = vmul.f32 %v659, %v938
        %v974 = vmul.f32 %v660, %v943
        %v975 = vmul.f32 %v661, %v943
        %v976 = vmul.f32 %v662, %v948
        %v977 = vmul.f32 %v663, %v948
        %v978 = vmul.f32 %v664, %v953
        %v979 = vmul.f32 %v665, %v953
        %v980 = vmul.f32 %v666, %v958
        %v981 = vmul.f32 %v667, %v958
        %v982 = vmul.f32 %v668, %v963
        %v983 = vmul.f32 %v669, %v963
        %v984 = vmul.f32 %v670, %v968
        %v985 = vmul.f32 %v671, %v968
        %v986 = vld [vmem:[%s4] sm:$0xff]
        %v987 = vld [vmem:[%s4 + $0x8] sm:$0xff]
        %v988 = vld [vmem:[%s4 + $0x10] sm:$0xff]
        %v989 = vld [vmem:[%s4 + $0x18] sm:$0xff]
        %v990 = vld [vmem:[%s4 + $0x20] sm:$0xff]
        %v991 = vld [vmem:[%s4 + $0x28] sm:$0xff]
        %v992 = vld [vmem:[%s4 + $0x30] sm:$0xff]
        %v993 = vld [vmem:[%s4 + $0x38] sm:$0xff]
        %995 = vset.pattern.permute.xlu0 0
        %996 = vperm.xlu0 %995, %v986
        %v997 = vpop.permute.xlu0 %996
        %1000 = vset.pattern.permute.xlu0 0
        %1001 = vperm.xlu0 %1000, %v987
        %v1002 = vpop.permute.xlu0 %1001
        %1005 = vset.pattern.permute.xlu0 0
        %1006 = vperm.xlu0 %1005, %v988
        %v1007 = vpop.permute.xlu0 %1006
        %1010 = vset.pattern.permute.xlu0 0
        %1011 = vperm.xlu0 %1010, %v989
        %v1012 = vpop.permute.xlu0 %1011
        %1015 = vset.pattern.permute.xlu0 0
        %1016 = vperm.xlu0 %1015, %v990
        %v1017 = vpop.permute.xlu0 %1016
        %1020 = vset.pattern.permute.xlu0 0
        %1021 = vperm.xlu0 %1020, %v991
        %v1022 = vpop.permute.xlu0 %1021
        %1025 = vset.pattern.permute.xlu0 0
        %1026 = vperm.xlu0 %1025, %v992
        %v1027 = vpop.permute.xlu0 %1026
        %1030 = vset.pattern.permute.xlu0 0
        %1031 = vperm.xlu0 %1030, %v993
        %v1032 = vpop.permute.xlu0 %1031
        %v1034 = vadd.f32 %v970, %v997
        %v1035 = vadd.f32 %v971, %v997
        %v1036 = vadd.f32 %v972, %v1002
        %v1037 = vadd.f32 %v973, %v1002
        %v1038 = vadd.f32 %v974, %v1007
        %v1039 = vadd.f32 %v975, %v1007
        %v1040 = vadd.f32 %v976, %v1012
        %v1041 = vadd.f32 %v977, %v1012
        %v1042 = vadd.f32 %v978, %v1017
        %v1043 = vadd.f32 %v979, %v1017
        %v1044 = vadd.f32 %v980, %v1022
        %v1045 = vadd.f32 %v981, %v1022
        %v1046 = vadd.f32 %v982, %v1027
        %v1047 = vadd.f32 %v983, %v1027
        %v1048 = vadd.f32 %v984, %v1032
        %v1049 = vadd.f32 %v985, %v1032
        %v1050 = vpack.c.bf16 %v1036, %v1034
        %v1051 = vpack.c.bf16 %v1037, %v1035
        %v1052 = vpack.c.bf16 %v1040, %v1038
        %v1053 = vpack.c.bf16 %v1041, %v1039
        %v1054 = vpack.c.bf16 %v1044, %v1042
        %v1055 = vpack.c.bf16 %v1045, %v1043
        %v1056 = vpack.c.bf16 %v1048, %v1046
        %v1057 = vpack.c.bf16 %v1049, %v1047
        %v1058 = vld [vmem:[%s5] sm:$0xf]
        %v1059 = vld [vmem:[%s5 + $0x4] sm:$0xf]
        %v1060 = vld [vmem:[%s5 + $0x8] sm:$0xf]
        %v1061 = vld [vmem:[%s5 + $0xc] sm:$0xf]
        %v1062 = vld [vmem:[%s5 + $0x10] sm:$0xf]
        %v1063 = vld [vmem:[%s5 + $0x14] sm:$0xf]
        %v1064 = vld [vmem:[%s5 + $0x18] sm:$0xf]
        %v1065 = vld [vmem:[%s5 + $0x1c] sm:$0xf]
        %v1066 = vld [vmem:[%s5 + $0x20] sm:$0xf]
        %v1067 = vld [vmem:[%s5 + $0x24] sm:$0xf]
        %v1068 = vld [vmem:[%s5 + $0x28] sm:$0xf]
        %v1069 = vld [vmem:[%s5 + $0x2c] sm:$0xf]
        %v1070 = vld [vmem:[%s5 + $0x30] sm:$0xf]
        %v1071 = vld [vmem:[%s5 + $0x34] sm:$0xf]
        %v1072 = vld [vmem:[%s5 + $0x38] sm:$0xf]
        %v1073 = vld [vmem:[%s5 + $0x3c] sm:$0xf]
        %v1074 = vld [vmem:[%s5 + $0x40] sm:$0xf]
        %v1075 = vld [vmem:[%s5 + $0x44] sm:$0xf]
        %v1076 = vld [vmem:[%s5 + $0x48] sm:$0xf]
        %v1077 = vld [vmem:[%s5 + $0x4c] sm:$0xf]
        %v1078 = vld [vmem:[%s5 + $0x50] sm:$0xf]
        %v1079 = vld [vmem:[%s5 + $0x54] sm:$0xf]
        %v1080 = vld [vmem:[%s5 + $0x58] sm:$0xf]
        %v1081 = vld [vmem:[%s5 + $0x5c] sm:$0xf]
        %v1082 = vld [vmem:[%s6] sm:$0xff]
        %v1083 = vld [vmem:[%s6 + $0x8] sm:$0xff]
        %v1084 = vld [vmem:[%s6 + $0x10] sm:$0xff]
        %v1085 = vld [vmem:[%s6 + $0x18] sm:$0xff]
        %v1086 = vld [vmem:[%s6 + $0x20] sm:$0xff]
        %v1087 = vld [vmem:[%s6 + $0x28] sm:$0xff]
        %v1088 = vld [vmem:[%s6 + $0x30] sm:$0xff]
        %v1089 = vld [vmem:[%s6 + $0x38] sm:$0xff]
        %v1090 = vld [vmem:[%s6 + $0x40] sm:$0xff]
        %v1091 = vld [vmem:[%s6 + $0x48] sm:$0xff]
        %v1092 = vld [vmem:[%s6 + $0x50] sm:$0xff]
        %v1093 = vld [vmem:[%s6 + $0x58] sm:$0xff]
        %v1094 = vld [vmem:[%s6 + $0x60] sm:$0xff]
        %v1095 = vld [vmem:[%s6 + $0x68] sm:$0xff]
        %v1096 = vld [vmem:[%s6 + $0x70] sm:$0xff]
        %v1097 = vld [vmem:[%s6 + $0x78] sm:$0xff]
        %v1098 = vld [vmem:[%s6 + $0x80] sm:$0xff]
        %v1099 = vld [vmem:[%s6 + $0x88] sm:$0xff]
        %v1100 = vld [vmem:[%s6 + $0x90] sm:$0xff]
        %v1101 = vld [vmem:[%s6 + $0x98] sm:$0xff]
        %v1102 = vld [vmem:[%s6 + $0xa0] sm:$0xff]
        %v1103 = vld [vmem:[%s6 + $0xa8] sm:$0xff]
        %v1104 = vld [vmem:[%s6 + $0xb0] sm:$0xff]
        %v1105 = vld [vmem:[%s6 + $0xb8] sm:$0xff]
        %1107 = vset.pattern.permute.xlu0 0
        %1108 = vperm.xlu0 %1107, %v1082
        %v1109 = vpop.permute.xlu0 %1108
        %1112 = vset.pattern.permute.xlu0 0
        %1113 = vperm.xlu0 %1112, %v1083
        %v1114 = vpop.permute.xlu0 %1113
        %1117 = vset.pattern.permute.xlu0 0
        %1118 = vperm.xlu0 %1117, %v1084
        %v1119 = vpop.permute.xlu0 %1118
        %1122 = vset.pattern.permute.xlu0 0
        %1123 = vperm.xlu0 %1122, %v1085
        %v1124 = vpop.permute.xlu0 %1123
        %1127 = vset.pattern.permute.xlu0 0
        %1128 = vperm.xlu0 %1127, %v1086
        %v1129 = vpop.permute.xlu0 %1128
        %1132 = vset.pattern.permute.xlu0 0
        %1133 = vperm.xlu0 %1132, %v1087
        %v1134 = vpop.permute.xlu0 %1133
        %1137 = vset.pattern.permute.xlu0 0
        %1138 = vperm.xlu0 %1137, %v1088
        %v1139 = vpop.permute.xlu0 %1138
        %1142 = vset.pattern.permute.xlu0 0
        %1143 = vperm.xlu0 %1142, %v1089
        %v1144 = vpop.permute.xlu0 %1143
        %1147 = vset.pattern.permute.xlu0 0
        %1148 = vperm.xlu0 %1147, %v1090
        %v1149 = vpop.permute.xlu0 %1148
        %1152 = vset.pattern.permute.xlu0 0
        %1153 = vperm.xlu0 %1152, %v1091
        %v1154 = vpop.permute.xlu0 %1153
        %1157 = vset.pattern.permute.xlu0 0
        %1158 = vperm.xlu0 %1157, %v1092
        %v1159 = vpop.permute.xlu0 %1158
        %1162 = vset.pattern.permute.xlu0 0
        %1163 = vperm.xlu0 %1162, %v1093
        %v1164 = vpop.permute.xlu0 %1163
        %1167 = vset.pattern.permute.xlu0 0
        %1168 = vperm.xlu0 %1167, %v1094
        %v1169 = vpop.permute.xlu0 %1168
        %1172 = vset.pattern.permute.xlu0 0
        %1173 = vperm.xlu0 %1172, %v1095
        %v1174 = vpop.permute.xlu0 %1173
        %1177 = vset.pattern.permute.xlu0 0
        %1178 = vperm.xlu0 %1177, %v1096
        %v1179 = vpop.permute.xlu0 %1178
        %1182 = vset.pattern.permute.xlu0 0
        %1183 = vperm.xlu0 %1182, %v1097
        %v1184 = vpop.permute.xlu0 %1183
        %1187 = vset.pattern.permute.xlu0 0
        %1188 = vperm.xlu0 %1187, %v1098
        %v1189 = vpop.permute.xlu0 %1188
        %1192 = vset.pattern.permute.xlu0 0
        %1193 = vperm.xlu0 %1192, %v1099
        %v1194 = vpop.permute.xlu0 %1193
        %1197 = vset.pattern.permute.xlu0 0
        %1198 = vperm.xlu0 %1197, %v1100
        %v1199 = vpop.permute.xlu0 %1198
        %1202 = vset.pattern.permute.xlu0 0
        %1203 = vperm.xlu0 %1202, %v1101
        %v1204 = vpop.permute.xlu0 %1203
        %1207 = vset.pattern.permute.xlu0 0
        %1208 = vperm.xlu0 %1207, %v1102
        %v1209 = vpop.permute.xlu0 %1208
        %1212 = vset.pattern.permute.xlu0 0
        %1213 = vperm.xlu0 %1212, %v1103
        %v1214 = vpop.permute.xlu0 %1213
        %1217 = vset.pattern.permute.xlu0 0
        %1218 = vperm.xlu0 %1217, %v1104
        %v1219 = vpop.permute.xlu0 %1218
        %1222 = vset.pattern.permute.xlu0 0
        %1223 = vperm.xlu0 %1222, %v1105
        %v1224 = vpop.permute.xlu0 %1223
        %v1250 = vunpack.c.l.b16 %v1058
        %v1251 = vunpack.c.l.b16 %v1059
        %v1252 = vunpack.c.l.b16 %v1060
        %v1253 = vunpack.c.l.b16 %v1061
        %v1254 = vunpack.c.l.b16 %v1062
        %v1255 = vunpack.c.l.b16 %v1063
        %v1256 = vunpack.c.l.b16 %v1064
        %v1257 = vunpack.c.l.b16 %v1065
        %v1258 = vunpack.c.l.b16 %v1066
        %v1259 = vunpack.c.l.b16 %v1067
        %v1260 = vunpack.c.l.b16 %v1068
        %v1261 = vunpack.c.l.b16 %v1069
        %v1262 = vunpack.c.l.b16 %v1070
        %v1263 = vunpack.c.l.b16 %v1071
        %v1264 = vunpack.c.l.b16 %v1072
        %v1265 = vunpack.c.l.b16 %v1073
        %v1266 = vunpack.c.l.b16 %v1074
        %v1267 = vunpack.c.l.b16 %v1075
        %v1268 = vunpack.c.l.b16 %v1076
        %v1269 = vunpack.c.l.b16 %v1077
        %v1270 = vunpack.c.l.b16 %v1078
        %v1271 = vunpack.c.l.b16 %v1079
        %v1272 = vunpack.c.l.b16 %v1080
        %v1273 = vunpack.c.l.b16 %v1081
        %v1274 = vpack.c.b16 %v1251, %v1250
        %v1275 = vpack.c.b16 %v1253, %v1252
        %v1276 = vpack.c.b16 %v1255, %v1254
        %v1277 = vpack.c.b16 %v1257, %v1256
        %v1278 = vpack.c.b16 %v1259, %v1258
        %v1279 = vpack.c.b16 %v1261, %v1260
        %v1280 = vpack.c.b16 %v1263, %v1262
        %v1281 = vpack.c.b16 %v1265, %v1264
        %v1282 = vpack.c.b16 %v1267, %v1266
        %v1283 = vpack.c.b16 %v1269, %v1268
        %v1284 = vpack.c.b16 %v1271, %v1270
        %v1285 = vpack.c.b16 %v1273, %v1272
        %v1287 = vsel %vm376, %v1274, 0
        %v1290 = vsel %vm376, %v1275, 0
        %v1293 = vsel %vm376, %v1276, 0
        %v1296 = vsel %vm376, %v1277, 0
        %v1299 = vsel %vm376, %v1278, 0
        %v1302 = vsel %vm376, %v1279, 0
        %v1305 = vsel %vm376, %v1280, 0
        %v1308 = vsel %vm376, %v1281, 0
        %v1311 = vsel %vm376, %v1282, 0
        %v1314 = vsel %vm376, %v1283, 0
        %v1317 = vsel %vm376, %v1284, 0
        %v1320 = vsel %vm376, %v1285, 0
        %1322 = vmatprep.subr.bf16.mxu0 %v1051
        %1323 = vmatpush1.bf16.msra.mxu0 %v1050
        %1324 = vmatprep.subr.bf16.mxu0 %v1053
        %1325 = vmatpush1.bf16.msra.mxu0 %v1052
        %1326 = vmatprep.subr.bf16.mxu0 %v1055
        %1327 = vmatpush1.bf16.msra.mxu0 %v1054
        %1328 = vmatprep.subr.bf16.mxu0 %v1057
        %1329 = vmatpush1.bf16.msra.mxu0 %v1056
        %1330 = vmatprep.subr.bf16.mxu0 0
        %1331 = vmatpush1.bf16.msra.mxu0 0
        %1332 = vmatprep.subr.bf16.mxu0 0
        %1333 = vmatpush1.bf16.msra.mxu0 0
        %1334 = vmatprep.subr.bf16.mxu0 0
        %1335 = vmatpush1.bf16.msra.mxu0 0
        %1336 = vmatprep.subr.bf16.mxu0 0
        %1337 = vmatpush1.bf16.msra.mxu0 0
        %1338 = vmatprep.subr.bf16.mxu0 0
        %1339 = vmatpush1.bf16.msra.mxu0 0
        %1340 = vmatprep.subr.bf16.mxu0 0
        %1341 = vmatpush1.bf16.msra.mxu0 0
        %1342 = vmatprep.subr.bf16.mxu0 0
        %1343 = vmatpush1.bf16.msra.mxu0 0
        %1344 = vmatprep.subr.bf16.mxu0 0
        %1345 = vmatpush1.bf16.msra.mxu0 0
        %1346 = vmatprep.subr.bf16.mxu0 0
        %1347 = vmatpush1.bf16.msra.mxu0 0
        %1348 = vmatprep.subr.bf16.mxu0 0
        %1349 = vmatpush1.bf16.msra.mxu0 0
        %1350 = vmatprep.subr.bf16.mxu0 0
        %1351 = vmatpush1.bf16.msra.mxu0 0
        %1352 = vmatprep.subr.bf16.mxu0 0
        %1353 = vmatpush1.bf16.msra.mxu0 0
        %1354 = vmatprep.mubr.bf16.mxu0 0
        %1355 = vmatmul.mubr.bf16.gmra.mrb[0].mxu0 %v1287
        %v1356 = vpop.f32.mrb[0].mxu0
        %v1357 = vadd.f32 %v1109, %v1356
        %v1358 = vpop.f32.mrb[0].mxu0
        %v1359 = vadd.f32 %v1109, %v1358
        %v1360 = vpop.f32.mrb[0].mxu0
        %v1361 = vadd.f32 %v1114, %v1360
        %v1362 = vpop.f32.mrb[0].mxu0
        %v1363 = vadd.f32 %v1114, %v1362
        %1364 = vmatprep.mubr.bf16.mxu0 0
        %1365 = vmatmul.mubr.bf16.gmra.mrb[0].mxu0 %v1290
        %v1366 = vpop.f32.mrb[0].mxu0
        %v1367 = vadd.f32 %v1119, %v1366
        %v1368 = vpop.f32.mrb[0].mxu0
        %v1369 = vadd.f32 %v1119, %v1368
        %v1370 = vpop.f32.mrb[0].mxu0
        %v1371 = vadd.f32 %v1124, %v1370
        %v1372 = vpop.f32.mrb[0].mxu0
        %v1373 = vadd.f32 %v1124, %v1372
        %1374 = vmatprep.mubr.bf16.mxu0 0
        %1375 = vmatmul.mubr.bf16.gmra.mrb[0].mxu0 %v1293
        %v1376 = vpop.f32.mrb[0].mxu0
        %v1377 = vadd.f32 %v1129, %v1376
        %v1378 = vpop.f32.mrb[0].mxu0
        %v1379 = vadd.f32 %v1129, %v1378
        %v1380 = vpop.f32.mrb[0].mxu0
        %v1381 = vadd.f32 %v1134, %v1380
        %v1382 = vpop.f32.mrb[0].mxu0
        %v1383 = vadd.f32 %v1134, %v1382
        %1384 = vmatprep.mubr.bf16.mxu0 0
        %1385 = vmatmul.mubr.bf16.gmra.mrb[0].mxu0 %v1296
        %v1386 = vpop.f32.mrb[0].mxu0
        %v1387 = vadd.f32 %v1139, %v1386
        %v1388 = vpop.f32.mrb[0].mxu0
        %v1389 = vadd.f32 %v1139, %v1388
        %v1390 = vpop.f32.mrb[0].mxu0
        %v1391 = vadd.f32 %v1144, %v1390
        %v1392 = vpop.f32.mrb[0].mxu0
        %v1393 = vadd.f32 %v1144, %v1392
        %1394 = vmatprep.mubr.bf16.mxu0 0
        %1395 = vmatmul.mubr.bf16.gmra.mrb[0].mxu0 %v1299
        %v1396 = vpop.f32.mrb[0].mxu0
        %v1397 = vadd.f32 %v1149, %v1396
        %v1398 = vpop.f32.mrb[0].mxu0
        %v1399 = vadd.f32 %v1149, %v1398
        %v1400 = vpop.f32.mrb[0].mxu0
        %v1401 = vadd.f32 %v1154, %v1400
        %v1402 = vpop.f32.mrb[0].mxu0
        %v1403 = vadd.f32 %v1154, %v1402
        %1404 = vmatprep.mubr.bf16.mxu0 0
        %1405 = vmatmul.mubr.bf16.gmra.mrb[0].mxu0 %v1302
        %v1406 = vpop.f32.mrb[0].mxu0
        %v1407 = vadd.f32 %v1159, %v1406
        %v1408 = vpop.f32.mrb[0].mxu0
        %v1409 = vadd.f32 %v1159, %v1408
        %v1410 = vpop.f32.mrb[0].mxu0
        %v1411 = vadd.f32 %v1164, %v1410
        %v1412 = vpop.f32.mrb[0].mxu0
        %v1413 = vadd.f32 %v1164, %v1412
        %1414 = vmatprep.mubr.bf16.mxu0 0
        %1415 = vmatmul.mubr.bf16.gmra.mrb[0].mxu0 %v1305
        %v1416 = vpop.f32.mrb[0].mxu0
        %v1417 = vadd.f32 %v1169, %v1416
        %v1418 = vpop.f32.mrb[0].mxu0
        %v1419 = vadd.f32 %v1169, %v1418
        %v1420 = vpop.f32.mrb[0].mxu0
        %v1421 = vadd.f32 %v1174, %v1420
        %v1422 = vpop.f32.mrb[0].mxu0
        %v1423 = vadd.f32 %v1174, %v1422
        %1424 = vmatprep.mubr.bf16.mxu0 0
        %1425 = vmatmul.mubr.bf16.gmra.mrb[0].mxu0 %v1308
        %v1426 = vpop.f32.mrb[0].mxu0
        %v1427 = vadd.f32 %v1179, %v1426
        %v1428 = vpop.f32.mrb[0].mxu0
        %v1429 = vadd.f32 %v1179, %v1428
        %v1430 = vpop.f32.mrb[0].mxu0
        %v1431 = vadd.f32 %v1184, %v1430
        %v1432 = vpop.f32.mrb[0].mxu0
        %v1433 = vadd.f32 %v1184, %v1432
        %1434 = vmatprep.mubr.bf16.mxu0 0
        %1435 = vmatmul.mubr.bf16.gmra.mrb[0].mxu0 %v1311
        %v1436 = vpop.f32.mrb[0].mxu0
        %v1437 = vadd.f32 %v1189, %v1436
        %v1438 = vpop.f32.mrb[0].mxu0
        %v1439 = vadd.f32 %v1189, %v1438
        %v1440 = vpop.f32.mrb[0].mxu0
        %v1441 = vadd.f32 %v1194, %v1440
        %v1442 = vpop.f32.mrb[0].mxu0
        %v1443 = vadd.f32 %v1194, %v1442
        %1444 = vmatprep.mubr.bf16.mxu0 0
        %1445 = vmatmul.mubr.bf16.gmra.mrb[0].mxu0 %v1314
        %v1446 = vpop.f32.mrb[0].mxu0
        %v1447 = vadd.f32 %v1199, %v1446
        %v1448 = vpop.f32.mrb[0].mxu0
        %v1449 = vadd.f32 %v1199, %v1448
        %v1450 = vpop.f32.mrb[0].mxu0
        %v1451 = vadd.f32 %v1204, %v1450
        %v1452 = vpop.f32.mrb[0].mxu0
        %v1453 = vadd.f32 %v1204, %v1452
        %1454 = vmatprep.mubr.bf16.mxu0 0
        %1455 = vmatmul.mubr.bf16.gmra.mrb[0].mxu0 %v1317
        %v1456 = vpop.f32.mrb[0].mxu0
        %v1457 = vadd.f32 %v1209, %v1456
        %v1458 = vpop.f32.mrb[0].mxu0
        %v1459 = vadd.f32 %v1209, %v1458
        %v1460 = vpop.f32.mrb[0].mxu0
        %v1461 = vadd.f32 %v1214, %v1460
        %v1462 = vpop.f32.mrb[0].mxu0
        %v1463 = vadd.f32 %v1214, %v1462
        %1464 = vmatprep.mubr.bf16.mxu0 0
        %1465 = vmatmul.mubr.bf16.gmra.mrb[0].mxu0 %v1320
        %v1466 = vpop.f32.mrb[0].mxu0
        %v1467 = vadd.f32 %v1219, %v1466
        %v1468 = vpop.f32.mrb[0].mxu0
        %v1469 = vadd.f32 %v1219, %v1468
        %v1470 = vpop.f32.mrb[0].mxu0
        %v1471 = vadd.f32 %v1224, %v1470
        %v1472 = vpop.f32.mrb[0].mxu0
        %v1473 = vadd.f32 %v1224, %v1472
        %1474 = vdwg.mxu0
        %v1475 = vpack.c.bf16 %v1361, %v1357
        %v1476 = vpack.c.bf16 %v1363, %v1359
        %v1477 = vpack.c.bf16 %v1371, %v1367
        %v1478 = vpack.c.bf16 %v1373, %v1369
        %v1479 = vpack.c.bf16 %v1381, %v1377
        %v1480 = vpack.c.bf16 %v1383, %v1379
        %v1481 = vpack.c.bf16 %v1391, %v1387
        %v1482 = vpack.c.bf16 %v1393, %v1389
        %v1483 = vpack.c.bf16 %v1401, %v1397
        %v1484 = vpack.c.bf16 %v1403, %v1399
        %v1485 = vpack.c.bf16 %v1411, %v1407
        %v1486 = vpack.c.bf16 %v1413, %v1409
        %v1487 = vpack.c.bf16 %v1421, %v1417
        %v1488 = vpack.c.bf16 %v1423, %v1419
        %v1489 = vpack.c.bf16 %v1431, %v1427
        %v1490 = vpack.c.bf16 %v1433, %v1429
        %v1491 = vpack.c.bf16 %v1441, %v1437
        %v1492 = vpack.c.bf16 %v1443, %v1439
        %v1493 = vpack.c.bf16 %v1451, %v1447
        %v1494 = vpack.c.bf16 %v1453, %v1449
        %v1495 = vpack.c.bf16 %v1461, %v1457
        %v1496 = vpack.c.bf16 %v1463, %v1459
        %v1497 = vpack.c.bf16 %v1471, %v1467
        %v1498 = vpack.c.bf16 %v1473, %v1469
        %1499 = vst [vmem:[#allocation2] sm:$0xff] %v1475
        %1500 = vst [vmem:[#allocation2 + $0x8] sm:$0xff] %v1476
        %1501 = vst [vmem:[#allocation2 + $0x10] sm:$0xff] %v1477
        %1502 = vst [vmem:[#allocation2 + $0x18] sm:$0xff] %v1478
        %1503 = vst [vmem:[#allocation2 + $0x20] sm:$0xff] %v1479
        %1504 = vst [vmem:[#allocation2 + $0x28] sm:$0xff] %v1480
        %1505 = vst [vmem:[#allocation2 + $0x30] sm:$0xff] %v1481
        %1506 = vst [vmem:[#allocation2 + $0x38] sm:$0xff] %v1482
        %1507 = vst [vmem:[#allocation2 + $0x40] sm:$0xff] %v1483
        %1508 = vst [vmem:[#allocation2 + $0x48] sm:$0xff] %v1484
        %1509 = vst [vmem:[#allocation2 + $0x50] sm:$0xff] %v1485
        %1510 = vst [vmem:[#allocation2 + $0x58] sm:$0xff] %v1486
        %1511 = vst [vmem:[#allocation2 + $0x60] sm:$0xff] %v1487
        %1512 = vst [vmem:[#allocation2 + $0x68] sm:$0xff] %v1488
        %1513 = vst [vmem:[#allocation2 + $0x70] sm:$0xff] %v1489
        %1514 = vst [vmem:[#allocation2 + $0x78] sm:$0xff] %v1490
        %1515 = vst [vmem:[#allocation2 + $0x80] sm:$0xff] %v1491
        %1516 = vst [vmem:[#allocation2 + $0x88] sm:$0xff] %v1492
        %1517 = vst [vmem:[#allocation2 + $0x90] sm:$0xff] %v1493
        %1518 = vst [vmem:[#allocation2 + $0x98] sm:$0xff] %v1494
        %1519 = vst [vmem:[#allocation2 + $0xa0] sm:$0xff] %v1495
        %1520 = vst [vmem:[#allocation2 + $0xa8] sm:$0xff] %v1496
        %1521 = vst [vmem:[#allocation2 + $0xb0] sm:$0xff] %v1497
        %1522 = vst [vmem:[#allocation2 + $0xb8] sm:$0xff] %v1498
        loop: start=0, step=1, limit=4
        $region57: #{tpu_custom_call.1} parent=55 // loop_pre_header
          _
        $region58: #{tpu_custom_call.1} parent=55 // loop_header
          %s1524 = sphi 0, %s1528
          %p1525 = scmp.ge.s32.totalorder %s1524, 4
        $region59: #{tpu_custom_call.1} parent=55 // loop_header_branch
          %1527 = sbr.rel (%p1525) target = $region63
        $region60: #{tpu_custom_call.1} parent=55 // loop_body
          %s1529 = smul.u32 %s1524, 16
          %s1530 = sadd.s32 %s1529, 64
          %s1531 = sadd.s32 %s1529, 128
          %s1532 = sshra.s32 %s1529, 4
          %s1533 = sand.u32 %s1529, 15
          %s1534 = smul.u32 %s1532, 2
          %s1535 = sadd.s32 0, %s1534
          %s1536 = smul.addr %s1535, 8
          %s1537 = scalar_lea.vmem [#allocation2], %s1536
          %v1538 = vld [vmem:[%s1537] sm:$0xff]
          %v1539 = vld [vmem:[%s1537 + $0x8] sm:$0xff]
          %v1540 = vunpack.c.l.bf16 %v1538
          %v1541 = vunpack.c.l.bf16 %v1539
          %v1542 = vunpack.c.h.bf16 %v1538
          %v1543 = vunpack.c.h.bf16 %v1539
          %1544 = vxpose.xlu0.b32.start [1/16] %v1540, 128
          %1545 = vxpose.xlu0.b32.cont [2/16] %v1542, 128
          %1546 = vxpose.xlu0.b32.cont [3/16] 0.0, 128
          %1547 = vxpose.xlu0.b32.cont [4/16] 0.0, 128
          %1548 = vxpose.xlu0.b32.cont [5/16] 0.0, 128
          %1549 = vxpose.xlu0.b32.cont [6/16] 0.0, 128
          %1550 = vxpose.xlu0.b32.cont [7/16] 0.0, 128
          %1551 = vxpose.xlu0.b32.cont [8/16] 0.0, 128
          %1552 = vxpose.xlu0.b32.cont [9/16] 0.0, 128
          %1553 = vxpose.xlu0.b32.cont [10/16] 0.0, 128
          %1554 = vxpose.xlu0.b32.cont [11/16] 0.0, 128
          %1555 = vxpose.xlu0.b32.cont [12/16] 0.0, 128
          %1556 = vxpose.xlu0.b32.cont [13/16] 0.0, 128
          %1557 = vxpose.xlu0.b32.cont [14/16] 0.0, 128
          %1558 = vxpose.xlu0.b32.cont [15/16] 0.0, 128
          %1559 = vxpose.xlu0.b32.end [16/16] 0.0, 128
          %v1560 = vpop.trf.xlu0
          %v1561 = vpop.trf.xlu0
          %v1562 = vpop.trf.xlu0
          %v1563 = vpop.trf.xlu0
          %v1564 = vpop.trf.xlu0
          %v1565 = vpop.trf.xlu0
          %v1566 = vpop.trf.xlu0
          %v1567 = vpop.trf.xlu0
          %v1568 = vpop.trf.xlu0
          %v1569 = vpop.trf.xlu0
          %v1570 = vpop.trf.xlu0
          %v1571 = vpop.trf.xlu0
          %v1572 = vpop.trf.xlu0
          %v1573 = vpop.trf.xlu0
          %v1574 = vpop.trf.xlu0
          %v1575 = vpop.trf.xlu0
          %1576 = vxpose.xlu0.b32.start [1/16] %v1541, 128
          %1577 = vxpose.xlu0.b32.cont [2/16] %v1543, 128
          %1578 = vxpose.xlu0.b32.cont [3/16] 0.0, 128
          %1579 = vxpose.xlu0.b32.cont [4/16] 0.0, 128
          %1580 = vxpose.xlu0.b32.cont [5/16] 0.0, 128
          %1581 = vxpose.xlu0.b32.cont [6/16] 0.0, 128
          %1582 = vxpose.xlu0.b32.cont [7/16] 0.0, 128
          %1583 = vxpose.xlu0.b32.cont [8/16] 0.0, 128
          %1584 = vxpose.xlu0.b32.cont [9/16] 0.0, 128
          %1585 = vxpose.xlu0.b32.cont [10/16] 0.0, 128
          %1586 = vxpose.xlu0.b32.cont [11/16] 0.0, 128
          %1587 = vxpose.xlu0.b32.cont [12/16] 0.0, 128
          %1588 = vxpose.xlu0.b32.cont [13/16] 0.0, 128
          %1589 = vxpose.xlu0.b32.cont [14/16] 0.0, 128
          %1590 = vxpose.xlu0.b32.cont [15/16] 0.0, 128
          %1591 = vxpose.xlu0.b32.end [16/16] 0.0, 128
          %v1592 = vpop.trf.xlu0
          %v1593 = vpop.trf.xlu0
          %v1594 = vpop.trf.xlu0
          %v1595 = vpop.trf.xlu0
          %v1596 = vpop.trf.xlu0
          %v1597 = vpop.trf.xlu0
          %v1598 = vpop.trf.xlu0
          %v1599 = vpop.trf.xlu0
          %v1600 = vpop.trf.xlu0
          %v1601 = vpop.trf.xlu0
          %v1602 = vpop.trf.xlu0
          %v1603 = vpop.trf.xlu0
          %v1604 = vpop.trf.xlu0
          %v1605 = vpop.trf.xlu0
          %v1606 = vpop.trf.xlu0
          %v1607 = vpop.trf.xlu0
          %v1608 = vpack.c.bf16 %v1561, %v1560
          %v1609 = vpack.c.bf16 %v1563, %v1562
          %v1610 = vpack.c.bf16 %v1565, %v1564
          %v1611 = vpack.c.bf16 %v1567, %v1566
          %v1612 = vpack.c.bf16 %v1569, %v1568
          %v1613 = vpack.c.bf16 %v1571, %v1570
          %v1614 = vpack.c.bf16 %v1573, %v1572
          %v1615 = vpack.c.bf16 %v1575, %v1574
          %v1616 = vpack.c.bf16 %v1593, %v1592
          %v1617 = vpack.c.bf16 %v1595, %v1594
          %v1618 = vpack.c.bf16 %v1597, %v1596
          %v1619 = vpack.c.bf16 %v1599, %v1598
          %v1620 = vpack.c.bf16 %v1601, %v1600
          %v1621 = vpack.c.bf16 %v1603, %v1602
          %v1622 = vpack.c.bf16 %v1605, %v1604
          %v1623 = vpack.c.bf16 %v1607, %v1606
          %s1624 = sshra.s32 %s1530, 4
          %s1625 = sand.u32 %s1530, 15
          %s1626 = smul.u32 %s1624, 2
          %s1627 = smul.addr %s1626, 8
          %s1628 = scalar_lea.vmem [#allocation2], %s1627
          %v1629 = vld [vmem:[%s1628] sm:$0xff]
          %v1630 = vld [vmem:[%s1628 + $0x8] sm:$0xff]
          %s1631 = sshra.s32 %s1531, 4
          %s1632 = sand.u32 %s1531, 15
          %s1633 = smul.u32 %s1631, 2
          %s1634 = smul.addr %s1633, 8
          %s1635 = scalar_lea.vmem [#allocation2], %s1634
          %v1636 = vld [vmem:[%s1635] sm:$0xff]
          %v1637 = vld [vmem:[%s1635 + $0x8] sm:$0xff]
          %vm1638 = vcmask 130048
          %v1640 = vsel %vm1638, %v1608, 0
          %v1643 = vsel %vm1638, %v1609, 0
          %v1646 = vsel %vm1638, %v1610, 0
          %v1649 = vsel %vm1638, %v1611, 0
          %v1652 = vsel %vm1638, %v1612, 0
          %v1655 = vsel %vm1638, %v1613, 0
          %v1658 = vsel %vm1638, %v1614, 0
          %v1661 = vsel %vm1638, %v1615, 0
          %v1664 = vsel %vm1638, %v1616, 0
          %v1667 = vsel %vm1638, %v1617, 0
          %v1670 = vsel %vm1638, %v1618, 0
          %v1673 = vsel %vm1638, %v1619, 0
          %v1676 = vsel %vm1638, %v1620, 0
          %v1679 = vsel %vm1638, %v1621, 0
          %v1682 = vsel %vm1638, %v1622, 0
          %v1685 = vsel %vm1638, %v1623, 0
          %1687 = vmatprep.subr.bf16.mxu0 %v1630
          %1688 = vmatpush1.bf16.msra.mxu0 %v1629
          %1689 = vmatprep.subr.bf16.mxu0 0
          %1690 = vmatpush1.bf16.msra.mxu0 0
          %1691 = vmatprep.subr.bf16.mxu0 0
          %1692 = vmatpush1.bf16.msra.mxu0 0
          %1693 = vmatprep.subr.bf16.mxu0 0
          %1694 = vmatpush1.bf16.msra.mxu0 0
          %1695 = vmatprep.subr.bf16.mxu0 0
          %1696 = vmatpush1.bf16.msra.mxu0 0
          %1697 = vmatprep.subr.bf16.mxu0 0
          %1698 = vmatpush1.bf16.msra.mxu0 0
          %1699 = vmatprep.subr.bf16.mxu0 0
          %1700 = vmatpush1.bf16.msra.mxu0 0
          %1701 = vmatprep.subr.bf16.mxu0 0
          %1702 = vmatpush1.bf16.msra.mxu0 0
          %1703 = vmatprep.subr.bf16.mxu0 0
          %1704 = vmatpush1.bf16.msra.mxu0 0
          %1705 = vmatprep.subr.bf16.mxu0 0
          %1706 = vmatpush1.bf16.msra.mxu0 0
          %1707 = vmatprep.subr.bf16.mxu0 0
          %1708 = vmatpush1.bf16.msra.mxu0 0
          %1709 = vmatprep.subr.bf16.mxu0 0
          %1710 = vmatpush1.bf16.msra.mxu0 0
          %1711 = vmatprep.subr.bf16.mxu0 0
          %1712 = vmatpush1.bf16.msra.mxu0 0
          %1713 = vmatprep.subr.bf16.mxu0 0
          %1714 = vmatpush1.bf16.msra.mxu0 0
          %1715 = vmatprep.subr.bf16.mxu0 0
          %1716 = vmatpush1.bf16.msra.mxu0 0
          %1717 = vmatprep.subr.bf16.mxu0 0
          %1718 = vmatpush1.bf16.msra.mxu0 0
          %1719 = vmatprep.mubr.bf16.mxu0 0
          %1720 = vmatmul.mubr.bf16.gmra.mrb[0].mxu0 %v1640
          %v1721 = vpop.f32.mrb[0].mxu0
          %v1722 = vadd.f32 0.0, %v1721
          %v1723 = vpop.f32.mrb[0].mxu0
          %v1724 = vadd.f32 0.0, %v1723
          %v1725 = vpop.f32.mrb[0].mxu0
          %v1726 = vadd.f32 0.0, %v1725
          %v1727 = vpop.f32.mrb[0].mxu0
          %v1728 = vadd.f32 0.0, %v1727
          %1729 = vmatprep.mubr.bf16.mxu0 0
          %1730 = vmatmul.mubr.bf16.gmra.mrb[0].mxu0 %v1643
          %v1731 = vpop.f32.mrb[0].mxu0
          %v1732 = vadd.f32 0.0, %v1731
          %v1733 = vpop.f32.mrb[0].mxu0
          %v1734 = vadd.f32 0.0, %v1733
          %v1735 = vpop.f32.mrb[0].mxu0
          %v1736 = vadd.f32 0.0, %v1735
          %v1737 = vpop.f32.mrb[0].mxu0
          %v1738 = vadd.f32 0.0, %v1737
          %1739 = vmatprep.mubr.bf16.mxu0 0
          %1740 = vmatmul.mubr.bf16.gmra.mrb[0].mxu0 %v1646
          %v1741 = vpop.f32.mrb[0].mxu0
          %v1742 = vadd.f32 0.0, %v1741
          %v1743 = vpop.f32.mrb[0].mxu0
          %v1744 = vadd.f32 0.0, %v1743
          %v1745 = vpop.f32.mrb[0].mxu0
          %v1746 = vadd.f32 0.0, %v1745
          %v1747 = vpop.f32.mrb[0].mxu0
          %v1748 = vadd.f32 0.0, %v1747
          %1749 = vmatprep.mubr.bf16.mxu0 0
          %1750 = vmatmul.mubr.bf16.gmra.mrb[0].mxu0 %v1649
          %v1751 = vpop.f32.mrb[0].mxu0
          %v1752 = vadd.f32 0.0, %v1751
          %v1753 = vpop.f32.mrb[0].mxu0
          %v1754 = vadd.f32 0.0, %v1753
          %v1755 = vpop.f32.mrb[0].mxu0
          %v1756 = vadd.f32 0.0, %v1755
          %v1757 = vpop.f32.mrb[0].mxu0
          %v1758 = vadd.f32 0.0, %v1757
          %1759 = vmatprep.mubr.bf16.mxu0 0
          %1760 = vmatmul.mubr.bf16.gmra.mrb[0].mxu0 %v1652
          %v1761 = vpop.f32.mrb[0].mxu0
          %v1762 = vadd.f32 0.0, %v1761
          %v1763 = vpop.f32.mrb[0].mxu0
          %v1764 = vadd.f32 0.0, %v1763
          %v1765 = vpop.f32.mrb[0].mxu0
          %v1766 = vadd.f32 0.0, %v1765
          %v1767 = vpop.f32.mrb[0].mxu0
          %v1768 = vadd.f32 0.0, %v1767
          %1769 = vmatprep.mubr.bf16.mxu0 0
          %1770 = vmatmul.mubr.bf16.gmra.mrb[0].mxu0 %v1655
          %v1771 = vpop.f32.mrb[0].mxu0
          %v1772 = vadd.f32 0.0, %v1771
          %v1773 = vpop.f32.mrb[0].mxu0
          %v1774 = vadd.f32 0.0, %v1773
          %v1775 = vpop.f32.mrb[0].mxu0
          %v1776 = vadd.f32 0.0, %v1775
          %v1777 = vpop.f32.mrb[0].mxu0
          %v1778 = vadd.f32 0.0, %v1777
          %1779 = vmatprep.mubr.bf16.mxu0 0
          %1780 = vmatmul.mubr.bf16.gmra.mrb[0].mxu0 %v1658
          %v1781 = vpop.f32.mrb[0].mxu0
          %v1782 = vadd.f32 0.0, %v1781
          %v1783 = vpop.f32.mrb[0].mxu0
          %v1784 = vadd.f32 0.0, %v1783
          %v1785 = vpop.f32.mrb[0].mxu0
          %v1786 = vadd.f32 0.0, %v1785
          %v1787 = vpop.f32.mrb[0].mxu0
          %v1788 = vadd.f32 0.0, %v1787
          %1789 = vmatprep.mubr.bf16.mxu0 0
          %1790 = vmatmul.mubr.bf16.gmra.mrb[0].mxu0 %v1661
          %v1791 = vpop.f32.mrb[0].mxu0
          %v1792 = vadd.f32 0.0, %v1791
          %v1793 = vpop.f32.mrb[0].mxu0
          %v1794 = vadd.f32 0.0, %v1793
          %v1795 = vpop.f32.mrb[0].mxu0
          %v1796 = vadd.f32 0.0, %v1795
          %v1797 = vpop.f32.mrb[0].mxu0
          %v1798 = vadd.f32 0.0, %v1797
          %1799 = vmatprep.mubr.bf16.mxu0 0
          %1800 = vmatmul.mubr.bf16.gmra.mrb[0].mxu0 %v1664
          %v1801 = vpop.f32.mrb[0].mxu0
          %v1802 = vadd.f32 0.0, %v1801
          %v1803 = vpop.f32.mrb[0].mxu0
          %v1804 = vadd.f32 0.0, %v1803
          %v1805 = vpop.f32.mrb[0].mxu0
          %v1806 = vadd.f32 0.0, %v1805
          %v1807 = vpop.f32.mrb[0].mxu0
          %v1808 = vadd.f32 0.0, %v1807
          %1809 = vmatprep.mubr.bf16.mxu0 0
          %1810 = vmatmul.mubr.bf16.gmra.mrb[0].mxu0 %v1667
          %v1811 = vpop.f32.mrb[0].mxu0
          %v1812 = vadd.f32 0.0, %v1811
          %v1813 = vpop.f32.mrb[0].mxu0
          %v1814 = vadd.f32 0.0, %v1813
          %v1815 = vpop.f32.mrb[0].mxu0
          %v1816 = vadd.f32 0.0, %v1815
          %v1817 = vpop.f32.mrb[0].mxu0
          %v1818 = vadd.f32 0.0, %v1817
          %1819 = vmatprep.mubr.bf16.mxu0 0
          %1820 = vmatmul.mubr.bf16.gmra.mrb[0].mxu0 %v1670
          %v1821 = vpop.f32.mrb[0].mxu0
          %v1822 = vadd.f32 0.0, %v1821
          %v1823 = vpop.f32.mrb[0].mxu0
          %v1824 = vadd.f32 0.0, %v1823
          %v1825 = vpop.f32.mrb[0].mxu0
          %v1826 = vadd.f32 0.0, %v1825
          %v1827 = vpop.f32.mrb[0].mxu0
          %v1828 = vadd.f32 0.0, %v1827
          %1829 = vmatprep.mubr.bf16.mxu0 0
          %1830 = vmatmul.mubr.bf16.gmra.mrb[0].mxu0 %v1673
          %v1831 = vpop.f32.mrb[0].mxu0
          %v1832 = vadd.f32 0.0, %v1831
          %v1833 = vpop.f32.mrb[0].mxu0
          %v1834 = vadd.f32 0.0, %v1833
          %v1835 = vpop.f32.mrb[0].mxu0
          %v1836 = vadd.f32 0.0, %v1835
          %v1837 = vpop.f32.mrb[0].mxu0
          %v1838 = vadd.f32 0.0, %v1837
          %1839 = vmatprep.mubr.bf16.mxu0 0
          %1840 = vmatmul.mubr.bf16.gmra.mrb[0].mxu0 %v1676
          %v1841 = vpop.f32.mrb[0].mxu0
          %v1842 = vadd.f32 0.0, %v1841
          %v1843 = vpop.f32.mrb[0].mxu0
          %v1844 = vadd.f32 0.0, %v1843
          %v1845 = vpop.f32.mrb[0].mxu0
          %v1846 = vadd.f32 0.0, %v1845
          %v1847 = vpop.f32.mrb[0].mxu0
          %v1848 = vadd.f32 0.0, %v1847
          %1849 = vmatprep.mubr.bf16.mxu0 0
          %1850 = vmatmul.mubr.bf16.gmra.mrb[0].mxu0 %v1679
          %v1851 = vpop.f32.mrb[0].mxu0
          %v1852 = vadd.f32 0.0, %v1851
          %v1853 = vpop.f32.mrb[0].mxu0
          %v1854 = vadd.f32 0.0, %v1853
          %v1855 = vpop.f32.mrb[0].mxu0
          %v1856 = vadd.f32 0.0, %v1855
          %v1857 = vpop.f32.mrb[0].mxu0
          %v1858 = vadd.f32 0.0, %v1857
          %1859 = vmatprep.mubr.bf16.mxu0 0
          %1860 = vmatmul.mubr.bf16.gmra.mrb[0].mxu0 %v1682
          %v1861 = vpop.f32.mrb[0].mxu0
          %v1862 = vadd.f32 0.0, %v1861
          %v1863 = vpop.f32.mrb[0].mxu0
          %v1864 = vadd.f32 0.0, %v1863
          %v1865 = vpop.f32.mrb[0].mxu0
          %v1866 = vadd.f32 0.0, %v1865
          %v1867 = vpop.f32.mrb[0].mxu0
          %v1868 = vadd.f32 0.0, %v1867
          %1869 = vmatprep.mubr.bf16.mxu0 0
          %1870 = vmatmul.mubr.bf16.gmra.mrb[0].mxu0 %v1685
          %v1871 = vpop.f32.mrb[0].mxu0
          %v1872 = vadd.f32 0.0, %v1871
          %v1873 = vpop.f32.mrb[0].mxu0
          %v1874 = vadd.f32 0.0, %v1873
          %v1875 = vpop.f32.mrb[0].mxu0
          %v1876 = vadd.f32 0.0, %v1875
          %v1877 = vpop.f32.mrb[0].mxu0
          %v1878 = vadd.f32 0.0, %v1877
          %1879 = vdwg.mxu0
          %v1880 = vmax.f32 %v1722, %v1724
          %1881 = vmax.xlane.f32.xlu0 %v1880
          %v1882 = vpop.xlane.xlu0 %1881
          %v1883 = vmax.f32 %v1726, %v1728
          %1884 = vmax.xlane.f32.xlu0 %v1883
          %v1885 = vpop.xlane.xlu0 %1884
          %v1886 = vmax.f32 %v1732, %v1734
          %1887 = vmax.xlane.f32.xlu0 %v1886
          %v1888 = vpop.xlane.xlu0 %1887
          %v1889 = vmax.f32 %v1736, %v1738
          %1890 = vmax.xlane.f32.xlu0 %v1889
          %v1891 = vpop.xlane.xlu0 %1890
          %v1892 = vmax.f32 %v1742, %v1744
          %1893 = vmax.xlane.f32.xlu0 %v1892
          %v1894 = vpop.xlane.xlu0 %1893
          %v1895 = vmax.f32 %v1746, %v1748
          %1896 = vmax.xlane.f32.xlu0 %v1895
          %v1897 = vpop.xlane.xlu0 %1896
          %v1898 = vmax.f32 %v1752, %v1754
          %1899 = vmax.xlane.f32.xlu0 %v1898
          %v1900 = vpop.xlane.xlu0 %1899
          %v1901 = vmax.f32 %v1756, %v1758
          %1902 = vmax.xlane.f32.xlu0 %v1901
          %v1903 = vpop.xlane.xlu0 %1902
          %v1904 = vmax.f32 %v1762, %v1764
          %1905 = vmax.xlane.f32.xlu0 %v1904
          %v1906 = vpop.xlane.xlu0 %1905
          %v1907 = vmax.f32 %v1766, %v1768
          %1908 = vmax.xlane.f32.xlu0 %v1907
          %v1909 = vpop.xlane.xlu0 %1908
          %v1910 = vmax.f32 %v1772, %v1774
          %1911 = vmax.xlane.f32.xlu0 %v1910
          %v1912 = vpop.xlane.xlu0 %1911
          %v1913 = vmax.f32 %v1776, %v1778
          %1914 = vmax.xlane.f32.xlu0 %v1913
          %v1915 = vpop.xlane.xlu0 %1914
          %v1916 = vmax.f32 %v1782, %v1784
          %1917 = vmax.xlane.f32.xlu0 %v1916
          %v1918 = vpop.xlane.xlu0 %1917
          %v1919 = vmax.f32 %v1786, %v1788
          %1920 = vmax.xlane.f32.xlu0 %v1919
          %v1921 = vpop.xlane.xlu0 %1920
          %v1922 = vmax.f32 %v1792, %v1794
          %1923 = vmax.xlane.f32.xlu0 %v1922
          %v1924 = vpop.xlane.xlu0 %1923
          %v1925 = vmax.f32 %v1796, %v1798
          %1926 = vmax.xlane.f32.xlu0 %v1925
          %v1927 = vpop.xlane.xlu0 %1926
          %v1928 = vmax.f32 %v1802, %v1804
          %1929 = vmax.xlane.f32.xlu0 %v1928
          %v1930 = vpop.xlane.xlu0 %1929
          %v1931 = vmax.f32 %v1806, %v1808
          %1932 = vmax.xlane.f32.xlu0 %v1931
          %v1933 = vpop.xlane.xlu0 %1932
          %v1934 = vmax.f32 %v1812, %v1814
          %1935 = vmax.xlane.f32.xlu0 %v1934
          %v1936 = vpop.xlane.xlu0 %1935
          %v1937 = vmax.f32 %v1816, %v1818
          %1938 = vmax.xlane.f32.xlu0 %v1937
          %v1939 = vpop.xlane.xlu0 %1938
          %v1940 = vmax.f32 %v1822, %v1824
          %1941 = vmax.xlane.f32.xlu0 %v1940
          %v1942 = vpop.xlane.xlu0 %1941
          %v1943 = vmax.f32 %v1826, %v1828
          %1944 = vmax.xlane.f32.xlu0 %v1943
          %v1945 = vpop.xlane.xlu0 %1944
          %v1946 = vmax.f32 %v1832, %v1834
          %1947 = vmax.xlane.f32.xlu0 %v1946
          %v1948 = vpop.xlane.xlu0 %1947
          %v1949 = vmax.f32 %v1836, %v1838
          %1950 = vmax.xlane.f32.xlu0 %v1949
          %v1951 = vpop.xlane.xlu0 %1950
          %v1952 = vmax.f32 %v1842, %v1844
          %1953 = vmax.xlane.f32.xlu0 %v1952
          %v1954 = vpop.xlane.xlu0 %1953
          %v1955 = vmax.f32 %v1846, %v1848
          %1956 = vmax.xlane.f32.xlu0 %v1955
          %v1957 = vpop.xlane.xlu0 %1956
          %v1958 = vmax.f32 %v1852, %v1854
          %1959 = vmax.xlane.f32.xlu0 %v1958
          %v1960 = vpop.xlane.xlu0 %1959
          %v1961 = vmax.f32 %v1856, %v1858
          %1962 = vmax.xlane.f32.xlu0 %v1961
          %v1963 = vpop.xlane.xlu0 %1962
          %v1964 = vmax.f32 %v1862, %v1864
          %1965 = vmax.xlane.f32.xlu0 %v1964
          %v1966 = vpop.xlane.xlu0 %1965
          %v1967 = vmax.f32 %v1866, %v1868
          %1968 = vmax.xlane.f32.xlu0 %v1967
          %v1969 = vpop.xlane.xlu0 %1968
          %v1970 = vmax.f32 %v1872, %v1874
          %1971 = vmax.xlane.f32.xlu0 %v1970
          %v1972 = vpop.xlane.xlu0 %1971
          %v1973 = vmax.f32 %v1876, %v1878
          %1974 = vmax.xlane.f32.xlu0 %v1973
          %v1975 = vpop.xlane.xlu0 %1974
          %v1976 = vsub.f32 %v1722, %v1882
          %v1977 = vsub.f32 %v1724, %v1882
          %v1978 = vsub.f32 %v1726, %v1885
          %v1979 = vsub.f32 %v1728, %v1885
          %v1980 = vsub.f32 %v1732, %v1888
          %v1981 = vsub.f32 %v1734, %v1888
          %v1982 = vsub.f32 %v1736, %v1891
          %v1983 = vsub.f32 %v1738, %v1891
          %v1984 = vsub.f32 %v1742, %v1894
          %v1985 = vsub.f32 %v1744, %v1894
          %v1986 = vsub.f32 %v1746, %v1897
          %v1987 = vsub.f32 %v1748, %v1897
          %v1988 = vsub.f32 %v1752, %v1900
          %v1989 = vsub.f32 %v1754, %v1900
          %v1990 = vsub.f32 %v1756, %v1903
          %v1991 = vsub.f32 %v1758, %v1903
          %v1992 = vsub.f32 %v1762, %v1906
          %v1993 = vsub.f32 %v1764, %v1906
          %v1994 = vsub.f32 %v1766, %v1909
          %v1995 = vsub.f32 %v1768, %v1909
          %v1996 = vsub.f32 %v1772, %v1912
          %v1997 = vsub.f32 %v1774, %v1912
          %v1998 = vsub.f32 %v1776, %v1915
          %v1999 = vsub.f32 %v1778, %v1915
          %v2000 = vsub.f32 %v1782, %v1918
          %v2001 = vsub.f32 %v1784, %v1918
          %v2002 = vsub.f32 %v1786, %v1921
          %v2003 = vsub.f32 %v1788, %v1921
          %v2004 = vsub.f32 %v1792, %v1924
          %v2005 = vsub.f32 %v1794, %v1924
          %v2006 = vsub.f32 %v1796, %v1927
          %v2007 = vsub.f32 %v1798, %v1927
          %v2008 = vsub.f32 %v1802, %v1930
          %v2009 = vsub.f32 %v1804, %v1930
          %v2010 = vsub.f32 %v1806, %v1933
          %v2011 = vsub.f32 %v1808, %v1933
          %v2012 = vsub.f32 %v1812, %v1936
          %v2013 = vsub.f32 %v1814, %v1936
          %v2014 = vsub.f32 %v1816, %v1939
          %v2015 = vsub.f32 %v1818, %v1939
          %v2016 = vsub.f32 %v1822, %v1942
          %v2017 = vsub.f32 %v1824, %v1942
          %v2018 = vsub.f32 %v1826, %v1945
          %v2019 = vsub.f32 %v1828, %v1945
          %v2020 = vsub.f32 %v1832, %v1948
          %v2021 = vsub.f32 %v1834, %v1948
          %v2022 = vsub.f32 %v1836, %v1951
          %v2023 = vsub.f32 %v1838, %v1951
          %v2024 = vsub.f32 %v1842, %v1954
          %v2025 = vsub.f32 %v1844, %v1954
          %v2026 = vsub.f32 %v1846, %v1957
          %v2027 = vsub.f32 %v1848, %v1957
          %v2028 = vsub.f32 %v1852, %v1960
          %v2029 = vsub.f32 %v1854, %v1960
          %v2030 = vsub.f32 %v1856, %v1963
          %v2031 = vsub.f32 %v1858, %v1963
          %v2032 = vsub.f32 %v1862, %v1966
          %v2033 = vsub.f32 %v1864, %v1966
          %v2034 = vsub.f32 %v1866, %v1969
          %v2035 = vsub.f32 %v1868, %v1969
          %v2036 = vsub.f32 %v1872, %v1972
          %v2037 = vsub.f32 %v1874, %v1972
          %v2038 = vsub.f32 %v1876, %v1975
          %v2039 = vsub.f32 %v1878, %v1975
          %v2040 = vmul.f32 %v1976, 1.442695
          %v2041 = vpow.pop %v2040
          %v2042 = vmul.f32 %v1977, 1.442695
          %v2043 = vpow.pop %v2042
          %v2044 = vmul.f32 %v1978, 1.442695
          %v2045 = vpow.pop %v2044
          %v2046 = vmul.f32 %v1979, 1.442695
          %v2047 = vpow.pop %v2046
          %v2048 = vmul.f32 %v1980, 1.442695
          %v2049 = vpow.pop %v2048
          %v2050 = vmul.f32 %v1981, 1.442695
          %v2051 = vpow.pop %v2050
          %v2052 = vmul.f32 %v1982, 1.442695
          %v2053 = vpow.pop %v2052
          %v2054 = vmul.f32 %v1983, 1.442695
          %v2055 = vpow.pop %v2054
          %v2056 = vmul.f32 %v1984, 1.442695
          %v2057 = vpow.pop %v2056
          %v2058 = vmul.f32 %v1985, 1.442695
          %v2059 = vpow.pop %v2058
          %v2060 = vmul.f32 %v1986, 1.442695
          %v2061 = vpow.pop %v2060
          %v2062 = vmul.f32 %v1987, 1.442695
          %v2063 = vpow.pop %v2062
          %v2064 = vmul.f32 %v1988, 1.442695
          %v2065 = vpow.pop %v2064
          %v2066 = vmul.f32 %v1989, 1.442695
          %v2067 = vpow.pop %v2066
          %v2068 = vmul.f32 %v1990, 1.442695
          %v2069 = vpow.pop %v2068
          %v2070 = vmul.f32 %v1991, 1.442695
          %v2071 = vpow.pop %v2070
          %v2072 = vmul.f32 %v1992, 1.442695
          %v2073 = vpow.pop %v2072
          %v2074 = vmul.f32 %v1993, 1.442695
          %v2075 = vpow.pop %v2074
          %v2076 = vmul.f32 %v1994, 1.442695
          %v2077 = vpow.pop %v2076
          %v2078 = vmul.f32 %v1995, 1.442695
          %v2079 = vpow.pop %v2078
          %v2080 = vmul.f32 %v1996, 1.442695
          %v2081 = vpow.pop %v2080
          %v2082 = vmul.f32 %v1997, 1.442695
          %v2083 = vpow.pop %v2082
          %v2084 = vmul.f32 %v1998, 1.442695
          %v2085 = vpow.pop %v2084
          %v2086 = vmul.f32 %v1999, 1.442695
          %v2087 = vpow.pop %v2086
          %v2088 = vmul.f32 %v2000, 1.442695
          %v2089 = vpow.pop %v2088
          %v2090 = vmul.f32 %v2001, 1.442695
          %v2091 = vpow.pop %v2090
          %v2092 = vmul.f32 %v2002, 1.442695
          %v2093 = vpow.pop %v2092
          %v2094 = vmul.f32 %v2003, 1.442695
          %v2095 = vpow.pop %v2094
          %v2096 = vmul.f32 %v2004, 1.442695
          %v2097 = vpow.pop %v2096
          %v2098 = vmul.f32 %v2005, 1.442695
          %v2099 = vpow.pop %v2098
          %v2100 = vmul.f32 %v2006, 1.442695
          %v2101 = vpow.pop %v2100
          %v2102 = vmul.f32 %v2007, 1.442695
          %v2103 = vpow.pop %v2102
          %v2104 = vmul.f32 %v2008, 1.442695
          %v2105 = vpow.pop %v2104
          %v2106 = vmul.f32 %v2009, 1.442695
          %v2107 = vpow.pop %v2106
          %v2108 = vmul.f32 %v2010, 1.442695
          %v2109 = vpow.pop %v2108
          %v2110 = vmul.f32 %v2011, 1.442695
          %v2111 = vpow.pop %v2110
          %v2112 = vmul.f32 %v2012, 1.442695
          %v2113 = vpow.pop %v2112
          %v2114 = vmul.f32 %v2013, 1.442695
          %v2115 = vpow.pop %v2114
          %v2116 = vmul.f32 %v2014, 1.442695
          %v2117 = vpow.pop %v2116
          %v2118 = vmul.f32 %v2015, 1.442695
          %v2119 = vpow.pop %v2118
          %v2120 = vmul.f32 %v2016, 1.442695
          %v2121 = vpow.pop %v2120
          %v2122 = vmul.f32 %v2017, 1.442695
          %v2123 = vpow.pop %v2122
          %v2124 = vmul.f32 %v2018, 1.442695
          %v2125 = vpow.pop %v2124
          %v2126 = vmul.f32 %v2019, 1.442695
          %v2127 = vpow.pop %v2126
          %v2128 = vmul.f32 %v2020, 1.442695
          %v2129 = vpow.pop %v2128
          %v2130 = vmul.f32 %v2021, 1.442695
          %v2131 = vpow.pop %v2130
          %v2132 = vmul.f32 %v2022, 1.442695
          %v2133 = vpow.pop %v2132
          %v2134 = vmul.f32 %v2023, 1.442695
          %v2135 = vpow.pop %v2134
          %v2136 = vmul.f32 %v2024, 1.442695
          %v2137 = vpow.pop %v2136
          %v2138 = vmul.f32 %v2025, 1.442695
          %v2139 = vpow.pop %v2138
          %v2140 = vmul.f32 %v2026, 1.442695
          %v2141 = vpow.pop %v2140
          %v2142 = vmul.f32 %v2027, 1.442695
          %v2143 = vpow.pop %v2142
          %v2144 = vmul.f32 %v2028, 1.442695
          %v2145 = vpow.pop %v2144
          %v2146 = vmul.f32 %v2029, 1.442695
          %v2147 = vpow.pop %v2146
          %v2148 = vmul.f32 %v2030, 1.442695
          %v2149 = vpow.pop %v2148
          %v2150 = vmul.f32 %v2031, 1.442695
          %v2151 = vpow.pop %v2150
          %v2152 = vmul.f32 %v2032, 1.442695
          %v2153 = vpow.pop %v2152
          %v2154 = vmul.f32 %v2033, 1.442695
          %v2155 = vpow.pop %v2154
          %v2156 = vmul.f32 %v2034, 1.442695
          %v2157 = vpow.pop %v2156
          %v2158 = vmul.f32 %v2035, 1.442695
          %v2159 = vpow.pop %v2158
          %v2160 = vmul.f32 %v2036, 1.442695
          %v2161 = vpow.pop %v2160
          %v2162 = vmul.f32 %v2037, 1.442695
          %v2163 = vpow.pop %v2162
          %v2164 = vmul.f32 %v2038, 1.442695
          %v2165 = vpow.pop %v2164
          %v2166 = vmul.f32 %v2039, 1.442695
          %v2167 = vpow.pop %v2166
          %v2168 = vadd.f32 %v2041, %v2043
          %2169 = vadd.xlane.f32.xlu0 %v2168
          %v2170 = vpop.xlane.xlu0 %2169
          %v2171 = vadd.f32 %v2045, %v2047
          %2172 = vadd.xlane.f32.xlu0 %v2171
          %v2173 = vpop.xlane.xlu0 %2172
          %v2174 = vadd.f32 %v2049, %v2051
          %2175 = vadd.xlane.f32.xlu0 %v2174
          %v2176 = vpop.xlane.xlu0 %2175
          %v2177 = vadd.f32 %v2053, %v2055
          %2178 = vadd.xlane.f32.xlu0 %v2177
          %v2179 = vpop.xlane.xlu0 %2178
          %v2180 = vadd.f32 %v2057, %v2059
          %2181 = vadd.xlane.f32.xlu0 %v2180
          %v2182 = vpop.xlane.xlu0 %2181
          %v2183 = vadd.f32 %v2061, %v2063
          %2184 = vadd.xlane.f32.xlu0 %v2183
          %v2185 = vpop.xlane.xlu0 %2184
          %v2186 = vadd.f32 %v2065, %v2067
          %2187 = vadd.xlane.f32.xlu0 %v2186
          %v2188 = vpop.xlane.xlu0 %2187
          %v2189 = vadd.f32 %v2069, %v2071
          %2190 = vadd.xlane.f32.xlu0 %v2189
          %v2191 = vpop.xlane.xlu0 %2190
          %v2192 = vadd.f32 %v2073, %v2075
          %2193 = vadd.xlane.f32.xlu0 %v2192
          %v2194 = vpop.xlane.xlu0 %2193
          %v2195 = vadd.f32 %v2077, %v2079
          %2196 = vadd.xlane.f32.xlu0 %v2195
          %v2197 = vpop.xlane.xlu0 %2196
          %v2198 = vadd.f32 %v2081, %v2083
          %2199 = vadd.xlane.f32.xlu0 %v2198
          %v2200 = vpop.xlane.xlu0 %2199
          %v2201 = vadd.f32 %v2085, %v2087
          %2202 = vadd.xlane.f32.xlu0 %v2201
          %v2203 = vpop.xlane.xlu0 %2202
          %v2204 = vadd.f32 %v2089, %v2091
          %2205 = vadd.xlane.f32.xlu0 %v2204
          %v2206 = vpop.xlane.xlu0 %2205
          %v2207 = vadd.f32 %v2093, %v2095
          %2208 = vadd.xlane.f32.xlu0 %v2207
          %v2209 = vpop.xlane.xlu0 %2208
          %v2210 = vadd.f32 %v2097, %v2099
          %2211 = vadd.xlane.f32.xlu0 %v2210
          %v2212 = vpop.xlane.xlu0 %2211
          %v2213 = vadd.f32 %v2101, %v2103
          %2214 = vadd.xlane.f32.xlu0 %v2213
          %v2215 = vpop.xlane.xlu0 %2214
          %v2216 = vadd.f32 %v2105, %v2107
          %2217 = vadd.xlane.f32.xlu0 %v2216
          %v2218 = vpop.xlane.xlu0 %2217
          %v2219 = vadd.f32 %v2109, %v2111
          %2220 = vadd.xlane.f32.xlu0 %v2219
          %v2221 = vpop.xlane.xlu0 %2220
          %v2222 = vadd.f32 %v2113, %v2115
          %2223 = vadd.xlane.f32.xlu0 %v2222
          %v2224 = vpop.xlane.xlu0 %2223
          %v2225 = vadd.f32 %v2117, %v2119
          %2226 = vadd.xlane.f32.xlu0 %v2225
          %v2227 = vpop.xlane.xlu0 %2226
          %v2228 = vadd.f32 %v2121, %v2123
          %2229 = vadd.xlane.f32.xlu0 %v2228
          %v2230 = vpop.xlane.xlu0 %2229
          %v2231 = vadd.f32 %v2125, %v2127
          %2232 = vadd.xlane.f32.xlu0 %v2231
          %v2233 = vpop.xlane.xlu0 %2232
          %v2234 = vadd.f32 %v2129, %v2131
          %2235 = vadd.xlane.f32.xlu0 %v2234
          %v2236 = vpop.xlane.xlu0 %2235
          %v2237 = vadd.f32 %v2133, %v2135
          %2238 = vadd.xlane.f32.xlu0 %v2237
          %v2239 = vpop.xlane.xlu0 %2238
          %v2240 = vadd.f32 %v2137, %v2139
          %2241 = vadd.xlane.f32.xlu0 %v2240
          %v2242 = vpop.xlane.xlu0 %2241
          %v2243 = vadd.f32 %v2141, %v2143
          %2244 = vadd.xlane.f32.xlu0 %v2243
          %v2245 = vpop.xlane.xlu0 %2244
          %v2246 = vadd.f32 %v2145, %v2147
          %2247 = vadd.xlane.f32.xlu0 %v2246
          %v2248 = vpop.xlane.xlu0 %2247
          %v2249 = vadd.f32 %v2149, %v2151
          %2250 = vadd.xlane.f32.xlu0 %v2249
          %v2251 = vpop.xlane.xlu0 %2250
          %v2252 = vadd.f32 %v2153, %v2155
          %2253 = vadd.xlane.f32.xlu0 %v2252
          %v2254 = vpop.xlane.xlu0 %2253
          %v2255 = vadd.f32 %v2157, %v2159
          %2256 = vadd.xlane.f32.xlu0 %v2255
          %v2257 = vpop.xlane.xlu0 %2256
          %v2258 = vadd.f32 %v2161, %v2163
          %2259 = vadd.xlane.f32.xlu0 %v2258
          %v2260 = vpop.xlane.xlu0 %2259
          %v2261 = vadd.f32 %v2165, %v2167
          %2262 = vadd.xlane.f32.xlu0 %v2261
          %v2263 = vpop.xlane.xlu0 %2262
          %v2264 = vpack.c.bf16 %v2045, %v2041
          %v2265 = vpack.c.bf16 %v2047, %v2043
          %v2266 = vpack.c.bf16 %v2053, %v2049
          %v2267 = vpack.c.bf16 %v2055, %v2051
          %v2268 = vpack.c.bf16 %v2061, %v2057
          %v2269 = vpack.c.bf16 %v2063, %v2059
          %v2270 = vpack.c.bf16 %v2069, %v2065
          %v2271 = vpack.c.bf16 %v2071, %v2067
          %v2272 = vpack.c.bf16 %v2077, %v2073
          %v2273 = vpack.c.bf16 %v2079, %v2075
          %v2274 = vpack.c.bf16 %v2085, %v2081
          %v2275 = vpack.c.bf16 %v2087, %v2083
          %v2276 = vpack.c.bf16 %v2093, %v2089
          %v2277 = vpack.c.bf16 %v2095, %v2091
          %v2278 = vpack.c.bf16 %v2101, %v2097
          %v2279 = vpack.c.bf16 %v2103, %v2099
          %v2280 = vpack.c.bf16 %v2109, %v2105
          %v2281 = vpack.c.bf16 %v2111, %v2107
          %v2282 = vpack.c.bf16 %v2117, %v2113
          %v2283 = vpack.c.bf16 %v2119, %v2115
          %v2284 = vpack.c.bf16 %v2125, %v2121
          %v2285 = vpack.c.bf16 %v2127, %v2123
          %v2286 = vpack.c.bf16 %v2133, %v2129
          %v2287 = vpack.c.bf16 %v2135, %v2131
          %v2288 = vpack.c.bf16 %v2141, %v2137
          %v2289 = vpack.c.bf16 %v2143, %v2139
          %v2290 = vpack.c.bf16 %v2149, %v2145
          %v2291 = vpack.c.bf16 %v2151, %v2147
          %v2292 = vpack.c.bf16 %v2157, %v2153
          %v2293 = vpack.c.bf16 %v2159, %v2155
          %v2294 = vpack.c.bf16 %v2165, %v2161
          %v2295 = vpack.c.bf16 %v2167, %v2163
          %2296 = vmatprep.subr.bf16.mxu0 %v1637
          %2297 = vmatpush1.bf16.xpose.msra.mxu0 %v1636
          %2298 = vmatprep.subr.bf16.mxu0 0
          %2299 = vmatpush1.bf16.xpose.msra.mxu0 0
          %2300 = vmatprep.subr.bf16.mxu0 0
          %2301 = vmatpush1.bf16.xpose.msra.mxu0 0
          %2302 = vmatprep.subr.bf16.mxu0 0
          %2303 = vmatpush1.bf16.xpose.msra.mxu0 0
          %2304 = vmatprep.subr.bf16.mxu0 0
          %2305 = vmatpush1.bf16.xpose.msra.mxu0 0
          %2306 = vmatprep.subr.bf16.mxu0 0
          %2307 = vmatpush1.bf16.xpose.msra.mxu0 0
          %2308 = vmatprep.subr.bf16.mxu0 0
          %2309 = vmatpush1.bf16.xpose.msra.mxu0 0
          %2310 = vmatprep.subr.bf16.mxu0 0
          %2311 = vmatpush1.bf16.xpose.msra.mxu0 0
          %2312 = vmatprep.subr.bf16.mxu0 0
          %2313 = vmatpush1.bf16.xpose.msra.mxu0 0
          %2314 = vmatprep.subr.bf16.mxu0 0
          %2315 = vmatpush1.bf16.xpose.msra.mxu0 0
          %2316 = vmatprep.subr.bf16.mxu0 0
          %2317 = vmatpush1.bf16.xpose.msra.mxu0 0
          %2318 = vmatprep.subr.bf16.mxu0 0
          %2319 = vmatpush1.bf16.xpose.msra.mxu0 0
          %2320 = vmatprep.subr.bf16.mxu0 0
          %2321 = vmatpush1.bf16.xpose.msra.mxu0 0
          %2322 = vmatprep.subr.bf16.mxu0 0
          %2323 = vmatpush1.bf16.xpose.msra.mxu0 0
          %2324 = vmatprep.subr.bf16.mxu0 0
          %2325 = vmatpush1.bf16.xpose.msra.mxu0 0
          %2326 = vmatprep.subr.bf16.mxu0 0
          %2327 = vmatpush1.bf16.xpose.msra.mxu0 0
          %2328 = vmatprep.mubr.bf16.mxu0 %v2265
          %2329 = vmatmul.mubr.bf16.gmra.mrb[0].mxu0 %v2264
          %v2330 = vpop.f32.mrb[0].mxu0
          %v2331 = vadd.f32 0.0, %v2330
          %v2332 = vpop.f32.mrb[0].mxu0
          %v2333 = vpop.f32.mrb[0].mxu0
          %v2334 = vadd.f32 0.0, %v2333
          %v2335 = vpop.f32.mrb[0].mxu0
          %2336 = vmatprep.mubr.bf16.mxu0 %v2267
          %2337 = vmatmul.mubr.bf16.gmra.mrb[0].mxu0 %v2266
          %v2338 = vpop.f32.mrb[0].mxu0
          %v2339 = vadd.f32 0.0, %v2338
          %v2340 = vpop.f32.mrb[0].mxu0
          %v2341 = vpop.f32.mrb[0].mxu0
          %v2342 = vadd.f32 0.0, %v2341
          %v2343 = vpop.f32.mrb[0].mxu0
          %2344 = vmatprep.mubr.bf16.mxu0 %v2269
          %2345 = vmatmul.mubr.bf16.gmra.mrb[0].mxu0 %v2268
          %v2346 = vpop.f32.mrb[0].mxu0
          %v2347 = vadd.f32 0.0, %v2346
          %v2348 = vpop.f32.mrb[0].mxu0
          %v2349 = vpop.f32.mrb[0].mxu0
          %v2350 = vadd.f32 0.0, %v2349
          %v2351 = vpop.f32.mrb[0].mxu0
          %2352 = vmatprep.mubr.bf16.mxu0 %v2271
          %2353 = vmatmul.mubr.bf16.gmra.mrb[0].mxu0 %v2270
          %v2354 = vpop.f32.mrb[0].mxu0
          %v2355 = vadd.f32 0.0, %v2354
          %v2356 = vpop.f32.mrb[0].mxu0
          %v2357 = vpop.f32.mrb[0].mxu0
          %v2358 = vadd.f32 0.0, %v2357
          %v2359 = vpop.f32.mrb[0].mxu0
          %2360 = vmatprep.mubr.bf16.mxu0 %v2273
          %2361 = vmatmul.mubr.bf16.gmra.mrb[0].mxu0 %v2272
          %v2362 = vpop.f32.mrb[0].mxu0
          %v2363 = vadd.f32 0.0, %v2362
          %v2364 = vpop.f32.mrb[0].mxu0
          %v2365 = vpop.f32.mrb[0].mxu0
          %v2366 = vadd.f32 0.0, %v2365
          %v2367 = vpop.f32.mrb[0].mxu0
          %2368 = vmatprep.mubr.bf16.mxu0 %v2275
          %2369 = vmatmul.mubr.bf16.gmra.mrb[0].mxu0 %v2274
          %v2370 = vpop.f32.mrb[0].mxu0
          %v2371 = vadd.f32 0.0, %v2370
          %v2372 = vpop.f32.mrb[0].mxu0
          %v2373 = vpop.f32.mrb[0].mxu0
          %v2374 = vadd.f32 0.0, %v2373
          %v2375 = vpop.f32.mrb[0].mxu0
          %2376 = vmatprep.mubr.bf16.mxu0 %v2277
          %2377 = vmatmul.mubr.bf16.gmra.mrb[0].mxu0 %v2276
          %v2378 = vpop.f32.mrb[0].mxu0
          %v2379 = vadd.f32 0.0, %v2378
          %v2380 = vpop.f32.mrb[0].mxu0
          %v2381 = vpop.f32.mrb[0].mxu0
          %v2382 = vadd.f32 0.0, %v2381
          %v2383 = vpop.f32.mrb[0].mxu0
          %2384 = vmatprep.mubr.bf16.mxu0 %v2279
          %2385 = vmatmul.mubr.bf16.gmra.mrb[0].mxu0 %v2278
          %v2386 = vpop.f32.mrb[0].mxu0
          %v2387 = vadd.f32 0.0, %v2386
          %v2388 = vpop.f32.mrb[0].mxu0
          %v2389 = vpop.f32.mrb[0].mxu0
          %v2390 = vadd.f32 0.0, %v2389
          %v2391 = vpop.f32.mrb[0].mxu0
          %2392 = vmatprep.mubr.bf16.mxu0 %v2281
          %2393 = vmatmul.mubr.bf16.gmra.mrb[0].mxu0 %v2280
          %v2394 = vpop.f32.mrb[0].mxu0
          %v2395 = vadd.f32 0.0, %v2394
          %v2396 = vpop.f32.mrb[0].mxu0
          %v2397 = vpop.f32.mrb[0].mxu0
          %v2398 = vadd.f32 0.0, %v2397
          %v2399 = vpop.f32.mrb[0].mxu0
          %2400 = vmatprep.mubr.bf16.mxu0 %v2283
          %2401 = vmatmul.mubr.bf16.gmra.mrb[0].mxu0 %v2282
          %v2402 = vpop.f32.mrb[0].mxu0
          %v2403 = vadd.f32 0.0, %v2402
          %v2404 = vpop.f32.mrb[0].mxu0
          %v2405 = vpop.f32.mrb[0].mxu0
          %v2406 = vadd.f32 0.0, %v2405
          %v2407 = vpop.f32.mrb[0].mxu0
          %2408 = vmatprep.mubr.bf16.mxu0 %v2285
          %2409 = vmatmul.mubr.bf16.gmra.mrb[0].mxu0 %v2284
          %v2410 = vpop.f32.mrb[0].mxu0
          %v2411 = vadd.f32 0.0, %v2410
          %v2412 = vpop.f32.mrb[0].mxu0
          %v2413 = vpop.f32.mrb[0].mxu0
          %v2414 = vadd.f32 0.0, %v2413
          %v2415 = vpop.f32.mrb[0].mxu0
          %2416 = vmatprep.mubr.bf16.mxu0 %v2287
          %2417 = vmatmul.mubr.bf16.gmra.mrb[0].mxu0 %v2286
          %v2418 = vpop.f32.mrb[0].mxu0
          %v2419 = vadd.f32 0.0, %v2418
          %v2420 = vpop.f32.mrb[0].mxu0
          %v2421 = vpop.f32.mrb[0].mxu0
          %v2422 = vadd.f32 0.0, %v2421
          %v2423 = vpop.f32.mrb[0].mxu0
          %2424 = vmatprep.mubr.bf16.mxu0 %v2289
          %2425 = vmatmul.mubr.bf16.gmra.mrb[0].mxu0 %v2288
          %v2426 = vpop.f32.mrb[0].mxu0
          %v2427 = vadd.f32 0.0, %v2426
          %v2428 = vpop.f32.mrb[0].mxu0
          %v2429 = vpop.f32.mrb[0].mxu0
          %v2430 = vadd.f32 0.0, %v2429
          %v2431 = vpop.f32.mrb[0].mxu0
          %2432 = vmatprep.mubr.bf16.mxu0 %v2291
          %2433 = vmatmul.mubr.bf16.gmra.mrb[0].mxu0 %v2290
          %v2434 = vpop.f32.mrb[0].mxu0
          %v2435 = vadd.f32 0.0, %v2434
          %v2436 = vpop.f32.mrb[0].mxu0
          %v2437 = vpop.f32.mrb[0].mxu0
          %v2438 = vadd.f32 0.0, %v2437
          %v2439 = vpop.f32.mrb[0].mxu0
          %2440 = vmatprep.mubr.bf16.mxu0 %v2293
          %2441 = vmatmul.mubr.bf16.gmra.mrb[0].mxu0 %v2292
          %v2442 = vpop.f32.mrb[0].mxu0
          %v2443 = vadd.f32 0.0, %v2442
          %v2444 = vpop.f32.mrb[0].mxu0
          %v2445 = vpop.f32.mrb[0].mxu0
          %v2446 = vadd.f32 0.0, %v2445
          %v2447 = vpop.f32.mrb[0].mxu0
          %2448 = vmatprep.mubr.bf16.mxu0 %v2295
          %2449 = vmatmul.mubr.bf16.gmra.mrb[0].mxu0 %v2294
          %v2450 = vpop.f32.mrb[0].mxu0
          %v2451 = vadd.f32 0.0, %v2450
          %v2452 = vpop.f32.mrb[0].mxu0
          %v2453 = vpop.f32.mrb[0].mxu0
          %v2454 = vadd.f32 0.0, %v2453
          %v2455 = vpop.f32.mrb[0].mxu0
          %2456 = vdwg.mxu0
          %v2457 = vrcp.pop %v2170
          %v2458 = vmul.f32 1.0, %v2457
          %v2459 = vrcp.pop %v2173
          %v2460 = vmul.f32 1.0, %v2459
          %v2461 = vrcp.pop %v2176
          %v2462 = vmul.f32 1.0, %v2461
          %v2463 = vrcp.pop %v2179
          %v2464 = vmul.f32 1.0, %v2463
          %v2465 = vrcp.pop %v2182
          %v2466 = vmul.f32 1.0, %v2465
          %v2467 = vrcp.pop %v2185
          %v2468 = vmul.f32 1.0, %v2467
          %v2469 = vrcp.pop %v2188
          %v2470 = vmul.f32 1.0, %v2469
          %v2471 = vrcp.pop %v2191
          %v2472 = vmul.f32 1.0, %v2471
          %v2473 = vrcp.pop %v2194
          %v2474 = vmul.f32 1.0, %v2473
          %v2475 = vrcp.pop %v2197
          %v2476 = vmul.f32 1.0, %v2475
          %v2477 = vrcp.pop %v2200
          %v2478 = vmul.f32 1.0, %v2477
          %v2479 = vrcp.pop %v2203
          %v2480 = vmul.f32 1.0, %v2479
          %v2481 = vrcp.pop %v2206
          %v2482 = vmul.f32 1.0, %v2481
          %v2483 = vrcp.pop %v2209
          %v2484 = vmul.f32 1.0, %v2483
          %v2485 = vrcp.pop %v2212
          %v2486 = vmul.f32 1.0, %v2485
          %v2487 = vrcp.pop %v2215
          %v2488 = vmul.f32 1.0, %v2487
          %v2489 = vrcp.pop %v2218
          %v2490 = vmul.f32 1.0, %v2489
          %v2491 = vrcp.pop %v2221
          %v2492 = vmul.f32 1.0, %v2491
          %v2493 = vrcp.pop %v2224
          %v2494 = vmul.f32 1.0, %v2493
          %v2495 = vrcp.pop %v2227
          %v2496 = vmul.f32 1.0, %v2495
          %v2497 = vrcp.pop %v2230
          %v2498 = vmul.f32 1.0, %v2497
          %v2499 = vrcp.pop %v2233
          %v2500 = vmul.f32 1.0, %v2499
          %v2501 = vrcp.pop %v2236
          %v2502 = vmul.f32 1.0, %v2501
          %v2503 = vrcp.pop %v2239
          %v2504 = vmul.f32 1.0, %v2503
          %v2505 = vrcp.pop %v2242
          %v2506 = vmul.f32 1.0, %v2505
          %v2507 = vrcp.pop %v2245
          %v2508 = vmul.f32 1.0, %v2507
          %v2509 = vrcp.pop %v2248
          %v2510 = vmul.f32 1.0, %v2509
          %v2511 = vrcp.pop %v2251
          %v2512 = vmul.f32 1.0, %v2511
          %v2513 = vrcp.pop %v2254
          %v2514 = vmul.f32 1.0, %v2513
          %v2515 = vrcp.pop %v2257
          %v2516 = vmul.f32 1.0, %v2515
          %v2517 = vrcp.pop %v2260
          %v2518 = vmul.f32 1.0, %v2517
          %v2519 = vrcp.pop %v2263
          %v2520 = vmul.f32 1.0, %v2519
          %v2521 = vmul.f32 %v2331, %v2458
          %v2522 = vmul.f32 %v2334, %v2460
          %v2523 = vmul.f32 %v2339, %v2462
          %v2524 = vmul.f32 %v2342, %v2464
          %v2525 = vmul.f32 %v2347, %v2466
          %v2526 = vmul.f32 %v2350, %v2468
          %v2527 = vmul.f32 %v2355, %v2470
          %v2528 = vmul.f32 %v2358, %v2472
          %v2529 = vmul.f32 %v2363, %v2474
          %v2530 = vmul.f32 %v2366, %v2476
          %v2531 = vmul.f32 %v2371, %v2478
          %v2532 = vmul.f32 %v2374, %v2480
          %v2533 = vmul.f32 %v2379, %v2482
          %v2534 = vmul.f32 %v2382, %v2484
          %v2535 = vmul.f32 %v2387, %v2486
          %v2536 = vmul.f32 %v2390, %v2488
          %v2537 = vmul.f32 %v2395, %v2490
          %v2538 = vmul.f32 %v2398, %v2492
          %v2539 = vmul.f32 %v2403, %v2494
          %v2540 = vmul.f32 %v2406, %v2496
          %v2541 = vmul.f32 %v2411, %v2498
          %v2542 = vmul.f32 %v2414, %v2500
          %v2543 = vmul.f32 %v2419, %v2502
          %v2544 = vmul.f32 %v2422, %v2504
          %v2545 = vmul.f32 %v2427, %v2506
          %v2546 = vmul.f32 %v2430, %v2508
          %v2547 = vmul.f32 %v2435, %v2510
          %v2548 = vmul.f32 %v2438, %v2512
          %v2549 = vmul.f32 %v2443, %v2514
          %v2550 = vmul.f32 %v2446, %v2516
          %v2551 = vmul.f32 %v2451, %v2518
          %v2552 = vmul.f32 %v2454, %v2520
          %2553 = vxpose.xlu0.b32.start [1/16] %v2521, 128
          %2554 = vxpose.xlu0.b32.cont [2/16] %v2522, 128
          %2555 = vxpose.xlu0.b32.cont [3/16] %v2523, 128
          %2556 = vxpose.xlu0.b32.cont [4/16] %v2524, 128
          %2557 = vxpose.xlu0.b32.cont [5/16] %v2525, 128
          %2558 = vxpose.xlu0.b32.cont [6/16] %v2526, 128
          %2559 = vxpose.xlu0.b32.cont [7/16] %v2527, 128
          %2560 = vxpose.xlu0.b32.cont [8/16] %v2528, 128
          %2561 = vxpose.xlu0.b32.cont [9/16] %v2529, 128
          %2562 = vxpose.xlu0.b32.cont [10/16] %v2530, 128
          %2563 = vxpose.xlu0.b32.cont [11/16] %v2531, 128
          %2564 = vxpose.xlu0.b32.cont [12/16] %v2532, 128
          %2565 = vxpose.xlu0.b32.cont [13/16] %v2533, 128
          %2566 = vxpose.xlu0.b32.cont [14/16] %v2534, 128
          %2567 = vxpose.xlu0.b32.cont [15/16] %v2535, 128
          %2568 = vxpose.xlu0.b32.end [16/16] %v2536, 128
          %v2569 = vpop.trf.xlu0
          %v2570 = vpop.trf.xlu0
          %v2571 = vpop.trf.xlu0
          %v2572 = vpop.trf.xlu0
          %v2573 = vpop.trf.xlu0
          %v2574 = vpop.trf.xlu0
          %v2575 = vpop.trf.xlu0
          %v2576 = vpop.trf.xlu0
          %v2577 = vpop.trf.xlu0
          %v2578 = vpop.trf.xlu0
          %v2579 = vpop.trf.xlu0
          %v2580 = vpop.trf.xlu0
          %v2581 = vpop.trf.xlu0
          %v2582 = vpop.trf.xlu0
          %v2583 = vpop.trf.xlu0
          %v2584 = vpop.trf.xlu0
          %2585 = vxpose.xlu0.b32.start [1/16] %v2537, 128
          %2586 = vxpose.xlu0.b32.cont [2/16] %v2538, 128
          %2587 = vxpose.xlu0.b32.cont [3/16] %v2539, 128
          %2588 = vxpose.xlu0.b32.cont [4/16] %v2540, 128
          %2589 = vxpose.xlu0.b32.cont [5/16] %v2541, 128
          %2590 = vxpose.xlu0.b32.cont [6/16] %v2542, 128
          %2591 = vxpose.xlu0.b32.cont [7/16] %v2543, 128
          %2592 = vxpose.xlu0.b32.cont [8/16] %v2544, 128
          %2593 = vxpose.xlu0.b32.cont [9/16] %v2545, 128
          %2594 = vxpose.xlu0.b32.cont [10/16] %v2546, 128
          %2595 = vxpose.xlu0.b32.cont [11/16] %v2547, 128
          %2596 = vxpose.xlu0.b32.cont [12/16] %v2548, 128
          %2597 = vxpose.xlu0.b32.cont [13/16] %v2549, 128
          %2598 = vxpose.xlu0.b32.cont [14/16] %v2550, 128
          %2599 = vxpose.xlu0.b32.cont [15/16] %v2551, 128
          %2600 = vxpose.xlu0.b32.end [16/16] %v2552, 128
          %v2601 = vpop.trf.xlu0
          %v2602 = vpop.trf.xlu0
          %v2603 = vpop.trf.xlu0
          %v2604 = vpop.trf.xlu0
          %v2605 = vpop.trf.xlu0
          %v2606 = vpop.trf.xlu0
          %v2607 = vpop.trf.xlu0
          %v2608 = vpop.trf.xlu0
          %v2609 = vpop.trf.xlu0
          %v2610 = vpop.trf.xlu0
          %v2611 = vpop.trf.xlu0
          %v2612 = vpop.trf.xlu0
          %v2613 = vpop.trf.xlu0
          %v2614 = vpop.trf.xlu0
          %v2615 = vpop.trf.xlu0
          %v2616 = vpop.trf.xlu0
          %v2617 = vpack.c.bf16 %v2570, %v2569
          %v2618 = vpack.c.bf16 %v2602, %v2601
          %s2619 = smul.addr %s1535, 8
          %s2620 = scalar_lea.vmem [#allocation3], %s2619
          %2621 = vst [vmem:[%s2620] sm:$0xff] %v2617
          %2622 = vst [vmem:[%s2620 + $0x8] sm:$0xff] %v2618
        $region61: #{tpu_custom_call.1} parent=55 // loop_footer
          %s1528 = sadd.s32 1, %s1524
        $region62: #{tpu_custom_call.1} parent=55 // loop_footer_branch
          %1523 = sbr.rel target = $region58
        $region63: #{tpu_custom_call.1} parent=55 // loop_exit
          _
        %v2623 = vld [vmem:[%s7] sm:$0xf]
        %v2624 = vld [vmem:[%s7 + $0x4] sm:$0xf]
        %v2625 = vld [vmem:[%s7 + $0x8] sm:$0xf]
        %v2626 = vld [vmem:[%s7 + $0xc] sm:$0xf]
        %v2627 = vld [vmem:[%s7 + $0x10] sm:$0xf]
        %v2628 = vld [vmem:[%s7 + $0x14] sm:$0xf]
        %v2629 = vld [vmem:[%s7 + $0x18] sm:$0xf]
        %v2630 = vld [vmem:[%s7 + $0x1c] sm:$0xf]
        %v2631 = vld [vmem:[#allocation3] sm:$0xff]
        %v2632 = vld [vmem:[#allocation3 + $0x8] sm:$0xff]
        %v2633 = vld [vmem:[#allocation3 + $0x10] sm:$0xff]
        %v2634 = vld [vmem:[#allocation3 + $0x18] sm:$0xff]
        %v2635 = vld [vmem:[#allocation3 + $0x20] sm:$0xff]
        %v2636 = vld [vmem:[#allocation3 + $0x28] sm:$0xff]
        %v2637 = vld [vmem:[#allocation3 + $0x30] sm:$0xff]
        %v2638 = vld [vmem:[#allocation3 + $0x38] sm:$0xff]
        %v2647 = vunpack.c.l.b16 %v2623
        %v2648 = vunpack.c.l.b16 %v2624
        %v2649 = vunpack.c.l.b16 %v2625
        %v2650 = vunpack.c.l.b16 %v2626
        %v2651 = vunpack.c.l.b16 %v2627
        %v2652 = vunpack.c.l.b16 %v2628
        %v2653 = vunpack.c.l.b16 %v2629
        %v2654 = vunpack.c.l.b16 %v2630
        %v2655 = vpack.c.b16 %v2648, %v2647
        %v2656 = vpack.c.b16 %v2650, %v2649
        %v2657 = vpack.c.b16 %v2652, %v2651
        %v2658 = vpack.c.b16 %v2654, %v2653
        %v2660 = vsel %vm376, %v2655, 0
        %v2663 = vsel %vm376, %v2656, 0
        %v2666 = vsel %vm376, %v2657, 0
        %v2669 = vsel %vm376, %v2658, 0
        %2671 = vmatprep.subr.bf16.mxu0 %v2632
        %2672 = vmatpush1.bf16.msra.mxu0 %v2631
        %2673 = vmatprep.subr.bf16.mxu0 %v2634
        %2674 = vmatpush1.bf16.msra.mxu0 %v2633
        %2675 = vmatprep.subr.bf16.mxu0 %v2636
        %2676 = vmatpush1.bf16.msra.mxu0 %v2635
        %2677 = vmatprep.subr.bf16.mxu0 %v2638
        %2678 = vmatpush1.bf16.msra.mxu0 %v2637
        %2679 = vmatprep.subr.bf16.mxu0 0
        %2680 = vmatpush1.bf16.msra.mxu0 0
        %2681 = vmatprep.subr.bf16.mxu0 0
        %2682 = vmatpush1.bf16.msra.mxu0 0
        %2683 = vmatprep.subr.bf16.mxu0 0
        %2684 = vmatpush1.bf16.msra.mxu0 0
        %2685 = vmatprep.subr.bf16.mxu0 0
        %2686 = vmatpush1.bf16.msra.mxu0 0
        %2687 = vmatprep.subr.bf16.mxu0 0
        %2688 = vmatpush1.bf16.msra.mxu0 0
        %2689 = vmatprep.subr.bf16.mxu0 0
        %2690 = vmatpush1.bf16.msra.mxu0 0
        %2691 = vmatprep.subr.bf16.mxu0 0
        %2692 = vmatpush1.bf16.msra.mxu0 0
        %2693 = vmatprep.subr.bf16.mxu0 0
        %2694 = vmatpush1.bf16.msra.mxu0 0
        %2695 = vmatprep.subr.bf16.mxu0 0
        %2696 = vmatpush1.bf16.msra.mxu0 0
        %2697 = vmatprep.subr.bf16.mxu0 0
        %2698 = vmatpush1.bf16.msra.mxu0 0
        %2699 = vmatprep.subr.bf16.mxu0 0
        %2700 = vmatpush1.bf16.msra.mxu0 0
        %2701 = vmatprep.subr.bf16.mxu0 0
        %2702 = vmatpush1.bf16.msra.mxu0 0
        %2703 = vmatprep.mubr.bf16.mxu0 0
        %2704 = vmatmul.mubr.bf16.gmra.mrb[0].mxu0 %v2660
        %v2705 = vpop.f32.mrb[0].mxu0
        %v2706 = vadd.f32 0.0, %v2705
        %v2707 = vpop.f32.mrb[0].mxu0
        %v2708 = vadd.f32 0.0, %v2707
        %v2709 = vpop.f32.mrb[0].mxu0
        %v2710 = vadd.f32 0.0, %v2709
        %v2711 = vpop.f32.mrb[0].mxu0
        %v2712 = vadd.f32 0.0, %v2711
        %2713 = vmatprep.mubr.bf16.mxu0 0
        %2714 = vmatmul.mubr.bf16.gmra.mrb[0].mxu0 %v2663
        %v2715 = vpop.f32.mrb[0].mxu0
        %v2716 = vadd.f32 0.0, %v2715
        %v2717 = vpop.f32.mrb[0].mxu0
        %v2718 = vadd.f32 0.0, %v2717
        %v2719 = vpop.f32.mrb[0].mxu0
        %v2720 = vadd.f32 0.0, %v2719
        %v2721 = vpop.f32.mrb[0].mxu0
        %v2722 = vadd.f32 0.0, %v2721
        %2723 = vmatprep.mubr.bf16.mxu0 0
        %2724 = vmatmul.mubr.bf16.gmra.mrb[0].mxu0 %v2666
        %v2725 = vpop.f32.mrb[0].mxu0
        %v2726 = vadd.f32 0.0, %v2725
        %v2727 = vpop.f32.mrb[0].mxu0
        %v2728 = vadd.f32 0.0, %v2727
        %v2729 = vpop.f32.mrb[0].mxu0
        %v2730 = vadd.f32 0.0, %v2729
        %v2731 = vpop.f32.mrb[0].mxu0
        %v2732 = vadd.f32 0.0, %v2731
        %2733 = vmatprep.mubr.bf16.mxu0 0
        %2734 = vmatmul.mubr.bf16.gmra.mrb[0].mxu0 %v2669
        %v2735 = vpop.f32.mrb[0].mxu0
        %v2736 = vadd.f32 0.0, %v2735
        %v2737 = vpop.f32.mrb[0].mxu0
        %v2738 = vadd.f32 0.0, %v2737
        %v2739 = vpop.f32.mrb[0].mxu0
        %v2740 = vadd.f32 0.0, %v2739
        %v2741 = vpop.f32.mrb[0].mxu0
        %v2742 = vadd.f32 0.0, %v2741
        %2743 = vdwg.mxu0
        %v2744 = vadd.f32 %v332, %v2706
        %v2745 = vadd.f32 %v333, %v2708
        %v2746 = vadd.f32 %v334, %v2710
        %v2747 = vadd.f32 %v335, %v2712
        %v2748 = vadd.f32 %v336, %v2716
        %v2749 = vadd.f32 %v337, %v2718
        %v2750 = vadd.f32 %v338, %v2720
        %v2751 = vadd.f32 %v339, %v2722
        %v2752 = vadd.f32 %v340, %v2726
        %v2753 = vadd.f32 %v341, %v2728
        %v2754 = vadd.f32 %v342, %v2730
        %v2755 = vadd.f32 %v343, %v2732
        %v2756 = vadd.f32 %v344, %v2736
        %v2757 = vadd.f32 %v345, %v2738
        %v2758 = vadd.f32 %v346, %v2740
        %v2759 = vadd.f32 %v347, %v2742
        %v2760 = vld [vmem:[%s8] sm:$0xff]
        %v2761 = vld [vmem:[%s8 + $0x8] sm:$0xff]
        %v2762 = vld [vmem:[%s8 + $0x10] sm:$0xff]
        %v2763 = vld [vmem:[%s8 + $0x18] sm:$0xff]
        %v2764 = vld [vmem:[%s8 + $0x20] sm:$0xff]
        %v2765 = vld [vmem:[%s8 + $0x28] sm:$0xff]
        %v2766 = vld [vmem:[%s8 + $0x30] sm:$0xff]
        %v2767 = vld [vmem:[%s8 + $0x38] sm:$0xff]
        %2769 = vset.pattern.permute.xlu0 0
        %2770 = vperm.xlu0 %2769, %v2760
        %v2771 = vpop.permute.xlu0 %2770
        %2774 = vset.pattern.permute.xlu0 0
        %2775 = vperm.xlu0 %2774, %v2761
        %v2776 = vpop.permute.xlu0 %2775
        %2779 = vset.pattern.permute.xlu0 0
        %2780 = vperm.xlu0 %2779, %v2762
        %v2781 = vpop.permute.xlu0 %2780
        %2784 = vset.pattern.permute.xlu0 0
        %2785 = vperm.xlu0 %2784, %v2763
        %v2786 = vpop.permute.xlu0 %2785
        %2789 = vset.pattern.permute.xlu0 0
        %2790 = vperm.xlu0 %2789, %v2764
        %v2791 = vpop.permute.xlu0 %2790
        %2794 = vset.pattern.permute.xlu0 0
        %2795 = vperm.xlu0 %2794, %v2765
        %v2796 = vpop.permute.xlu0 %2795
        %2799 = vset.pattern.permute.xlu0 0
        %2800 = vperm.xlu0 %2799, %v2766
        %v2801 = vpop.permute.xlu0 %2800
        %2804 = vset.pattern.permute.xlu0 0
        %2805 = vperm.xlu0 %2804, %v2767
        %v2806 = vpop.permute.xlu0 %2805
        %v2808 = vadd.f32 %v2744, %v2771
        %v2809 = vadd.f32 %v2745, %v2771
        %v2810 = vadd.f32 %v2746, %v2776
        %v2811 = vadd.f32 %v2747, %v2776
        %v2812 = vadd.f32 %v2748, %v2781
        %v2813 = vadd.f32 %v2749, %v2781
        %v2814 = vadd.f32 %v2750, %v2786
        %v2815 = vadd.f32 %v2751, %v2786
        %v2816 = vadd.f32 %v2752, %v2791
        %v2817 = vadd.f32 %v2753, %v2791
        %v2818 = vadd.f32 %v2754, %v2796
        %v2819 = vadd.f32 %v2755, %v2796
        %v2820 = vadd.f32 %v2756, %v2801
        %v2821 = vadd.f32 %v2757, %v2801
        %v2822 = vadd.f32 %v2758, %v2806
        %v2823 = vadd.f32 %v2759, %v2806
        %2824 = vst [vmem:[%s325] sm:$0xff] %v2808
        %2825 = vst [vmem:[%s325 + $0x8] sm:$0xff] %v2809
        %2826 = vst [vmem:[%s325 + $0x10] sm:$0xff] %v2810
        %2827 = vst [vmem:[%s325 + $0x18] sm:$0xff] %v2811
        %2828 = vst [vmem:[%s325 + $0x20] sm:$0xff] %v2812
        %2829 = vst [vmem:[%s325 + $0x28] sm:$0xff] %v2813
        %2830 = vst [vmem:[%s325 + $0x30] sm:$0xff] %v2814
        %2831 = vst [vmem:[%s325 + $0x38] sm:$0xff] %v2815
        %2832 = vst [vmem:[%s325 + $0x40] sm:$0xff] %v2816
        %2833 = vst [vmem:[%s325 + $0x48] sm:$0xff] %v2817
        %2834 = vst [vmem:[%s325 + $0x50] sm:$0xff] %v2818
        %2835 = vst [vmem:[%s325 + $0x58] sm:$0xff] %v2819
        %2836 = vst [vmem:[%s325 + $0x60] sm:$0xff] %v2820
        %2837 = vst [vmem:[%s325 + $0x68] sm:$0xff] %v2821
        %2838 = vst [vmem:[%s325 + $0x70] sm:$0xff] %v2822
        %2839 = vst [vmem:[%s325 + $0x78] sm:$0xff] %v2823
        %s2840 = sand.u32 %s225, 1
        %s2841 = scalar_lea.sflag [#allocation5], %s2840
        %s2842 = sand.u32 %s225, 1
        %s2843 = smul.addr %s2842, 128
        %s2844 = scalar_lea.vmem [#allocation4], %s2843
        // Predicated region
        $region64: #{tpu_custom_call.1} parent=55 // pred_check
          %p2845 = pneg %p235
        $region65: #{tpu_custom_call.1} parent=55 // pred_check_branch
          %2847 = sbr.rel (%p2845) target = $region67
        $region66: #{tpu_custom_call.1} parent=55 // pred_region
          %s2849 = ssub.s32 2048, 2048
          %2850 = vsyncadd %s2841, %s2849
          %s2851 = smul.addr %s23, 16
          %s2852 = smul.addr %s2851, 128
          %s2853 = scalar_lea.hbm %s9, %s2852
          %s2854 = sshll.u32 %s2844, 4
          %s2855 = int_to_ptr.vmem [resolvable:$true] %s2854
          %2860 = dma.vmem_to_hbm [thread:$0]  %s2855, 2048, %s2853, %s2841, 256, 256, 16
        $region67: #{tpu_custom_call.1} parent=55 // pred_fallthru
          _
      $region56: #{tpu_custom_call.1} parent=5 // pred_fallthru
        _
      %p2861 = scmp.le.s32.totalorder 2, %s18
      // Predicated region
      $region68: #{tpu_custom_call.1} parent=5 // pred_check
        %p2862 = pneg %p2861
      $region69: #{tpu_custom_call.1} parent=5 // pred_check_branch
        %2864 = sbr.rel (%p2862) target = $region71
      $region70: #{tpu_custom_call.1} parent=5 // pred_region
        %s2865 = ssub.s32 %s18, 2
        // Predicated region
        $region72: #{tpu_custom_call.1} parent=70 // pred_check
          %p2866 = pneg %p241
        $region73: #{tpu_custom_call.1} parent=70 // pred_check_branch
          %2868 = sbr.rel (%p2866) target = $region75
        $region74: #{tpu_custom_call.1} parent=70 // pred_region
          %s2869 = sand.u32 %s226, 1
          %s2870 = scalar_lea.sflag [#allocation5], %s2869
          %s2871 = sand.u32 %s226, 1
          %s2872 = smul.addr %s2871, 128
          %s2873 = scalar_lea.vmem [#allocation4], %s2872
          %2874 = dma.done %s2870, 2048
        $region75: #{tpu_custom_call.1} parent=70 // pred_fallthru
          _
      $region71: #{tpu_custom_call.1} parent=5 // pred_fallthru
        _
    $region6: #{tpu_custom_call.1} parent=1 // loop_footer
      %s22 = sadd.s32 1, %s18
    $region7: #{tpu_custom_call.1} parent=1 // loop_footer_branch
      %17 = sbr.rel target = $region3
    $region8: #{tpu_custom_call.1} parent=1 // loop_exit
      _
    %2875 = vsyncpa [#allocation5], 1
    %s2876 = scalar_lea.sflag [#allocation5], 1
    %2877 = vsyncpa %s2876, 1

</llo_original>
